<compile_context>
chip_gen: v7x
topology: tpu7x:2x2x1
jax: 0.10.0
libtpu: 0.0.40
codegen_flags: <defaults>
</compile_context>

<pallas_src>
import math
import functools

import jax
import jax.numpy as jnp
import numpy as np
from jax.experimental import pallas as pl
from jax.experimental.pallas import tpu as pltpu


# ----------------------------- kernel helpers -----------------------------

def _layernorm(v, gamma, beta, eps=1e-5):
    # PyTorch LayerNorm: biased variance, eps=1e-5.  v: (N, H); gamma/beta: (1, H).
    mu = jnp.mean(v, axis=-1, keepdims=True)
    var = jnp.mean((v - mu) ** 2, axis=-1, keepdims=True)
    return (v - mu) * jax.lax.rsqrt(var + eps) * gamma + beta


def _gelu_exact(v):
    # nn.GELU() default = exact erf formulation.
    return 0.5 * v * (1.0 + jax.lax.erf(v * (1.0 / math.sqrt(2.0))))


# ----------------------------- Pallas kernel ------------------------------

def transformer_block_kernel(
    x_ref,                       # (N, H)   N = Bb*S tokens handled by this grid step
    wq_ref, bq_ref,              # (H, H), (1, H)   pre-transposed Q projection
    wk_ref, bk_ref,              # (H, H), (1, H)
    wv_ref, bv_ref,              # (H, H), (1, H)
    wo_ref, bo_ref,              # (H, H), (1, H)   pre-transposed out projection
    g1_ref, be1_ref,             # (1, H)           norm1 weight / bias
    w1_ref, b1_ref,              # (H, I), (1, I)   pre-transposed FF linear1
    w2_ref, b2_ref,              # (I, H), (1, H)   pre-transposed FF linear2
    g2_ref, be2_ref,             # (1, H)           norm2 weight / bias
    et_ref,                      # (M, N)  token -> (batch, head, token) expansion, M = Bb*NH*S
    hm_ref,                      # (M, H)  block-diagonal head mask
    gg_ref,                      # (M, M)  per-(batch,head) segment-sum broadcast matrix
    bias_ref,                    # (N, M)  additive score mask: 0 valid / -1e9 cross-batch
    fix_ref,                     # (N, M)  1.0 on cross-batch entries (denominator guard)
    o_ref,                       # (N, H)
    *, num_heads,
):
    x = x_ref[...]                                   # (N, H) float32
    H = x.shape[-1]
    scale = 1.0 / math.sqrt(H // num_heads)

    # ---- QKV projections (weights already transposed: no in-kernel .T) ----
    q = jnp.dot(x, wq_ref[...], preferred_element_type=jnp.float32) + bq_ref[...]
    k = jnp.dot(x, wk_ref[...], preferred_element_type=jnp.float32) + bk_ref[...]
    v = jnp.dot(x, wv_ref[...], preferred_element_type=jnp.float32) + bv_ref[...]

    # ---- head expansion: row m=(b,h,t) of kx/vx is k/v of token (b,t) with all
    # ---- lanes outside head h zeroed (block-diagonal head mask).
    et = et_ref[...]
    hm = hm_ref[...]
    kx = jnp.dot(et, k, preferred_element_type=jnp.float32) * hm    # (M, H)
    vx = jnp.dot(et, v, preferred_element_type=jnp.float32) * hm    # (M, H)

    # ---- all heads / all batch rows in one score matmul (contract on H) ----
    s = jax.lax.dot_general(q * scale, kx, (((1,), (1,)), ((), ())),
                            preferred_element_type=jnp.float32)     # (N, M)
    s = s + bias_ref[...]                            # kill cross-batch pairs
    s = s - jnp.max(s, axis=-1, keepdims=True)       # row shift (softmax invariant)
    e = jnp.exp(s)                                   # cross-batch entries underflow to 0
    # per-(batch, head) softmax denominators, broadcast back with one matmul
    denom = jnp.dot(e, gg_ref[...], preferred_element_type=jnp.float32)   # (N, M)
    p = e * pl.reciprocal(denom + fix_ref[...], approx=True)
    ctx = jnp.dot(p, vx, preferred_element_type=jnp.float32)        # (N, H)

    attn = (jnp.dot(ctx, wo_ref[...], preferred_element_type=jnp.float32)
            + bo_ref[...])                           # (N, H)

    # ---- residual + LayerNorm 1 -------------------------------------------
    x1 = _layernorm(x + attn, g1_ref[...], be1_ref[...])

    # ---- feed-forward: Linear -> GELU -> Linear ----------------------------
    h1 = (jnp.dot(x1, w1_ref[...], preferred_element_type=jnp.float32)
          + b1_ref[...])                             # (N, I)
    h1 = _gelu_exact(h1)
    ff = (jnp.dot(h1, w2_ref[...], preferred_element_type=jnp.float32)
          + b2_ref[...])                             # (N, H)

    # ---- residual + LayerNorm 2 --------------------------------------------
    x2 = _layernorm(x1 + ff, g2_ref[...], be2_ref[...])

    o_ref[...] = x2.astype(o_ref.dtype)


# ------------------------- constant matrix builder --------------------------

def _build_attention_constants(Bb, S, NH, hd):
    """Constant 0/1 matrices that let one kernel step do all heads / all batches."""
    H = NH * hd
    N = Bb * S
    M = Bb * NH * S

    # Et[(b,h,t), (b2,t2)] = 1 iff b==b2 and t==t2
    Et = np.zeros((M, N), np.float32)
    for b in range(Bb):
        for h in range(NH):
            r0 = (b * NH + h) * S
            Et[r0:r0 + S, b * S:(b + 1) * S] = np.eye(S, dtype=np.float32)

    # HM[(b,h,t), d] = 1 iff d belongs to head h
    head_of_d = (np.arange(H) // hd)
    HM = np.zeros((M, H), np.float32)
    for b in range(Bb):
        for h in range(NH):
            r0 = (b * NH + h) * S
            HM[r0:r0 + S, :] = (head_of_d == h).astype(np.float32)[None, :]

    # GG[m, m2] = 1 iff same (batch, head) group  (softmax segment-sum broadcast)
    GG = np.zeros((M, M), np.float32)
    for g in range(Bb * NH):
        GG[g * S:(g + 1) * S, g * S:(g + 1) * S] = 1.0

    # cross-batch masking for the fused score matrix
    batch_of_n = np.arange(N) // S
    batch_of_m = np.arange(M) // (NH * S)
    valid = (batch_of_n[:, None] == batch_of_m[None, :]).astype(np.float32)  # (N, M)
    attn_bias = (valid - 1.0) * 1e9     # 0 where valid, -1e9 where cross-batch
    denom_fix = 1.0 - valid             # 1 where cross-batch (avoids 0 * inf)

    return Et, HM, GG, attn_bias, denom_fix


# ------------------------------- wrapper ------------------------------------

def transformer_block(x, params, num_heads, *, num_batch_blocks=1):
    B, S, H = x.shape
    I = params["w1"].shape[0]
    hd = H // num_heads
    assert B % num_batch_blocks == 0
    Bb = B // num_batch_blocks          # batch elements per grid step
    N = Bb * S                          # tokens per grid step
    M = Bb * num_heads * S              # head-expanded rows per grid step

    # One-time weight prep in XLA (outside the kernel): split + transpose.
    wqkv_t = params["wqkv"].T           # (H, 3H)
    wq_t, wk_t, wv_t = wqkv_t[:, 0:H], wqkv_t[:, H:2 * H], wqkv_t[:, 2 * H:3 * H]
    bq = params["bqkv"][:, 0:H]
    bk = params["bqkv"][:, H:2 * H]
    bv = params["bqkv"][:, 2 * H:3 * H]
    wo_t = params["wo"].T               # (H, H)
    w1_t = params["w1"].T               # (H, I)
    w2_t = params["w2"].T               # (I, H)

    Et, HM, GG, attn_bias, denom_fix = _build_attention_constants(Bb, S, num_heads, hd)

    x2d = x.reshape(B * S, H)           # batch-major token slab

    def const_spec(shape):
        return pl.BlockSpec(shape, lambda i: (0,) * len(shape))

    in_specs = [
        pl.BlockSpec((N, H), lambda i: (i, 0)),      # x tokens for this step
        const_spec((H, H)), const_spec((1, H)),      # wq_t, bq
        const_spec((H, H)), const_spec((1, H)),      # wk_t, bk
        const_spec((H, H)), const_spec((1, H)),      # wv_t, bv
        const_spec((H, H)), const_spec((1, H)),      # wo_t, bo
        const_spec((1, H)), const_spec((1, H)),      # norm1 gamma / beta
        const_spec((H, I)), const_spec((1, I)),      # w1_t, b1
        const_spec((I, H)), const_spec((1, H)),      # w2_t, b2
        const_spec((1, H)), const_spec((1, H)),      # norm2 gamma / beta
        const_spec((M, N)), const_spec((M, H)),      # Et, HM
        const_spec((M, M)),                          # GG
        const_spec((N, M)), const_spec((N, M)),      # attn_bias, denom_fix
    ]

    kernel = functools.partial(transformer_block_kernel, num_heads=num_heads)

    out2d = pl.pallas_call(
        kernel,
        out_shape=jax.ShapeDtypeStruct((B * S, H), x.dtype),
        grid_spec=pltpu.PrefetchScalarGridSpec(
            num_scalar_prefetch=0,
            grid=(num_batch_blocks,),
            in_specs=in_specs,
            out_specs=pl.BlockSpec((N, H), lambda i: (i, 0)),
        ),
        compiler_params=pltpu.CompilerParams(
            dimension_semantics=("parallel",)),
    )(
        x2d,
        wq_t, bq, wk_t, bk, wv_t, bv,
        wo_t, params["bo"],
        params["g1"], params["be1"],
        w1_t, params["b1"],
        w2_t, params["b2"],
        params["g2"], params["be2"],
        jnp.asarray(Et), jnp.asarray(HM), jnp.asarray(GG),
        jnp.asarray(attn_bias), jnp.asarray(denom_fix),
    )
    return out2d.reshape(B, S, H)


# --------------------------- pure-JAX reference ----------------------------

def reference_forward(x, p, num_heads):
    B, S, H = x.shape
    hd = H // num_heads
    qkv = x @ p["wqkv"].T + p["bqkv"][0]
    q, k, v = jnp.split(qkv, 3, axis=-1)

    def split_heads(t):
        return t.reshape(B, S, num_heads, hd).transpose(0, 2, 1, 3)

    qh, kh, vh = split_heads(q), split_heads(k), split_heads(v)
    scores = jnp.einsum("bhqd,bhkd->bhqk", qh, kh) / math.sqrt(hd)
    probs = jax.nn.softmax(scores, axis=-1)
    ctx = jnp.einsum("bhqk,bhkd->bhqd", probs, vh)
    ctx = ctx.transpose(0, 2, 1, 3).reshape(B, S, H)
    attn = ctx @ p["wo"].T + p["bo"][0]

    def ln(v_, g, b, eps=1e-5):
        mu = jnp.mean(v_, axis=-1, keepdims=True)
        var = jnp.mean((v_ - mu) ** 2, axis=-1, keepdims=True)
        return (v_ - mu) / jnp.sqrt(var + eps) * g[0] + b[0]

    x1 = ln(x + attn, p["g1"], p["be1"])
    h1 = jax.nn.gelu(x1 @ p["w1"].T + p["b1"][0], approximate=False)
    ff = h1 @ p["w2"].T + p["b2"][0]
    x2 = ln(x1 + ff, p["g2"], p["be2"])
    return x2


# --------------------------------- main ------------------------------------

if __name__ == "__main__":
    # Config: hidden_size=32, num_attention_heads=4, intermediate_size=64
    B, S, H, NH, I = 2, 8, 32, 4, 64

    key = jax.random.PRNGKey(0)
    keys = jax.random.split(key, 8)

    params = {
        "wqkv": 0.02 * jax.random.normal(keys[0], (3 * H, H), jnp.float32),
        "bqkv": jnp.zeros((1, 3 * H), jnp.float32),
        "wo":   0.02 * jax.random.normal(keys[1], (H, H), jnp.float32),
        "bo":   jnp.zeros((1, H), jnp.float32),
        "g1":   jnp.ones((1, H), jnp.float32),
        "be1":  jnp.zeros((1, H), jnp.float32),
        "w1":   0.02 * jax.random.normal(keys[2], (I, H), jnp.float32),
        "b1":   0.01 * jax.random.normal(keys[3], (1, I), jnp.float32),
        "w2":   0.02 * jax.random.normal(keys[4], (H, I), jnp.float32),
        "b2":   0.01 * jax.random.normal(keys[5], (1, H), jnp.float32),
        "g2":   jnp.ones((1, H), jnp.float32),
        "be2":  jnp.zeros((1, H), jnp.float32),
    }

    x = jax.random.normal(keys[6], (B, S, H), jnp.float32)

    ref = reference_forward(x, params, NH)

    # Fully fused, single grid step: best on single-TensorCore chips (v5e / v6e).
    out_fused = jax.block_until_ready(transformer_block(x, params, NH, num_batch_blocks=1))
    # Two parallel batch blocks: keeps both TensorCores busy on v7x.
    out_split = jax.block_until_ready(transformer_block(x, params, NH, num_batch_blocks=2))

    assert out_fused.shape == (B, S, H)
    assert out_split.shape == (B, S, H)
    err_fused = float(jnp.max(jnp.abs(out_fused - ref)))
    err_split = float(jnp.max(jnp.abs(out_split - ref)))
    assert err_fused < 1e-3, f"fused max abs err {err_fused}"
    assert err_split < 1e-3, f"split max abs err {err_split}"

    print("KERNEL_OK")
</pallas_src>

<mosaic_0001>
module attributes {stable_mosaic.version = 11 : i64} {
  func.func @transformer_block_kernel(%arg0: i32, %arg1: memref<16x32xf32, #tpu.memory_space<vmem>>, %arg2: memref<32x32xf32, #tpu.memory_space<vmem>>, %arg3: memref<1x32xf32, #tpu.memory_space<vmem>>, %arg4: memref<32x32xf32, #tpu.memory_space<vmem>>, %arg5: memref<1x32xf32, #tpu.memory_space<vmem>>, %arg6: memref<32x32xf32, #tpu.memory_space<vmem>>, %arg7: memref<1x32xf32, #tpu.memory_space<vmem>>, %arg8: memref<32x32xf32, #tpu.memory_space<vmem>>, %arg9: memref<1x32xf32, #tpu.memory_space<vmem>>, %arg10: memref<1x32xf32, #tpu.memory_space<vmem>>, %arg11: memref<1x32xf32, #tpu.memory_space<vmem>>, %arg12: memref<32x64xf32, #tpu.memory_space<vmem>>, %arg13: memref<1x64xf32, #tpu.memory_space<vmem>>, %arg14: memref<64x32xf32, #tpu.memory_space<vmem>>, %arg15: memref<1x32xf32, #tpu.memory_space<vmem>>, %arg16: memref<1x32xf32, #tpu.memory_space<vmem>>, %arg17: memref<1x32xf32, #tpu.memory_space<vmem>>, %arg18: memref<64x16xf32, #tpu.memory_space<vmem>>, %arg19: memref<64x32xf32, #tpu.memory_space<vmem>>, %arg20: memref<64x64xf32, #tpu.memory_space<vmem>>, %arg21: memref<16x64xf32, #tpu.memory_space<vmem>>, %arg22: memref<16x64xf32, #tpu.memory_space<vmem>>, %arg23: memref<16x32xf32, #tpu.memory_space<vmem>>) attributes {dimension_semantics = [#tpu.dimension_semantics<parallel>], iteration_bounds = array<i64: 1>, scalar_prefetch = 0 : i64, scratch_operands = 0 : i64, tpu.core_type = #tpu.core_type<tc>, window_params = [{transform_indices = @transform_0, window_bounds = array<i64: 16, 32>}, {pipeline_mode = #tpu.pipeline_mode<synchronous>, transform_indices = @transform_1, window_bounds = array<i64: 32, 32>}, {pipeline_mode = #tpu.pipeline_mode<synchronous>, transform_indices = @transform_2, window_bounds = array<i64: 1, 32>}, {pipeline_mode = #tpu.pipeline_mode<synchronous>, transform_indices = @transform_3, window_bounds = array<i64: 32, 32>}, {pipeline_mode = #tpu.pipeline_mode<synchronous>, transform_indices = @transform_4, window_bounds = array<i64: 1, 32>}, {pipeline_mode = #tpu.pipeline_mode<synchronous>, transform_indices = @transform_5, window_bounds = array<i64: 32, 32>}, {pipeline_mode = #tpu.pipeline_mode<synchronous>, transform_indices = @transform_6, window_bounds = array<i64: 1, 32>}, {pipeline_mode = #tpu.pipeline_mode<synchronous>, transform_indices = @transform_7, window_bounds = array<i64: 32, 32>}, {pipeline_mode = #tpu.pipeline_mode<synchronous>, transform_indices = @transform_8, window_bounds = array<i64: 1, 32>}, {pipeline_mode = #tpu.pipeline_mode<synchronous>, transform_indices = @transform_9, window_bounds = array<i64: 1, 32>}, {pipeline_mode = #tpu.pipeline_mode<synchronous>, transform_indices = @transform_10, window_bounds = array<i64: 1, 32>}, {pipeline_mode = #tpu.pipeline_mode<synchronous>, transform_indices = @transform_11, window_bounds = array<i64: 32, 64>}, {pipeline_mode = #tpu.pipeline_mode<synchronous>, transform_indices = @transform_12, window_bounds = array<i64: 1, 64>}, {pipeline_mode = #tpu.pipeline_mode<synchronous>, transform_indices = @transform_13, window_bounds = array<i64: 64, 32>}, {pipeline_mode = #tpu.pipeline_mode<synchronous>, transform_indices = @transform_14, window_bounds = array<i64: 1, 32>}, {pipeline_mode = #tpu.pipeline_mode<synchronous>, transform_indices = @transform_15, window_bounds = array<i64: 1, 32>}, {pipeline_mode = #tpu.pipeline_mode<synchronous>, transform_indices = @transform_16, window_bounds = array<i64: 1, 32>}, {pipeline_mode = #tpu.pipeline_mode<synchronous>, transform_indices = @transform_17, window_bounds = array<i64: 64, 16>}, {pipeline_mode = #tpu.pipeline_mode<synchronous>, transform_indices = @transform_18, window_bounds = array<i64: 64, 32>}, {pipeline_mode = #tpu.pipeline_mode<synchronous>, transform_indices = @transform_19, window_bounds = array<i64: 64, 64>}, {pipeline_mode = #tpu.pipeline_mode<synchronous>, transform_indices = @transform_20, window_bounds = array<i64: 16, 64>}, {pipeline_mode = #tpu.pipeline_mode<synchronous>, transform_indices = @transform_21, window_bounds = array<i64: 16, 64>}, {transform_indices = @transform_22, window_bounds = array<i64: 16, 32>}]} {
    %c0 = arith.constant 0 : index
    %c0_0 = arith.constant 0 : index
    %0 = vector.load %arg1[%c0, %c0_0] : memref<16x32xf32, #tpu.memory_space<vmem>>, vector<16x32xf32>
    %c0_1 = arith.constant 0 : index
    %c0_2 = arith.constant 0 : index
    %1 = vector.load %arg2[%c0_1, %c0_2] : memref<32x32xf32, #tpu.memory_space<vmem>>, vector<32x32xf32>
    %cst = arith.constant dense<0.000000e+00> : vector<16x32xf32>
    %2 = tpu.matmul %0, %1, %cst {dimension_numbers = #tpu.dot_dimension_numbers<[1], [0], [0], [1], [0, 0, 1, 1], [], []>} : vector<16x32xf32>, vector<32x32xf32>, vector<16x32xf32> -> vector<16x32xf32>
    %c0_3 = arith.constant 0 : index
    %c0_4 = arith.constant 0 : index
    %3 = vector.load %arg3[%c0_3, %c0_4] : memref<1x32xf32, #tpu.memory_space<vmem>>, vector<1x32xf32>
    %4 = vector.broadcast %3 : vector<1x32xf32> to vector<16x32xf32>
    %5 = arith.addf %2, %4 : vector<16x32xf32>
    %c0_5 = arith.constant 0 : index
    %c0_6 = arith.constant 0 : index
    %6 = vector.load %arg4[%c0_5, %c0_6] : memref<32x32xf32, #tpu.memory_space<vmem>>, vector<32x32xf32>
    %cst_7 = arith.constant dense<0.000000e+00> : vector<16x32xf32>
    %7 = tpu.matmul %0, %6, %cst_7 {dimension_numbers = #tpu.dot_dimension_numbers<[1], [0], [0], [1], [0, 0, 1, 1], [], []>} : vector<16x32xf32>, vector<32x32xf32>, vector<16x32xf32> -> vector<16x32xf32>
    %c0_8 = arith.constant 0 : index
    %c0_9 = arith.constant 0 : index
    %8 = vector.load %arg5[%c0_8, %c0_9] : memref<1x32xf32, #tpu.memory_space<vmem>>, vector<1x32xf32>
    %9 = vector.broadcast %8 : vector<1x32xf32> to vector<16x32xf32>
    %10 = arith.addf %7, %9 : vector<16x32xf32>
    %c0_10 = arith.constant 0 : index
    %c0_11 = arith.constant 0 : index
    %11 = vector.load %arg6[%c0_10, %c0_11] : memref<32x32xf32, #tpu.memory_space<vmem>>, vector<32x32xf32>
    %cst_12 = arith.constant dense<0.000000e+00> : vector<16x32xf32>
    %12 = tpu.matmul %0, %11, %cst_12 {dimension_numbers = #tpu.dot_dimension_numbers<[1], [0], [0], [1], [0, 0, 1, 1], [], []>} : vector<16x32xf32>, vector<32x32xf32>, vector<16x32xf32> -> vector<16x32xf32>
    %c0_13 = arith.constant 0 : index
    %c0_14 = arith.constant 0 : index
    %13 = vector.load %arg7[%c0_13, %c0_14] : memref<1x32xf32, #tpu.memory_space<vmem>>, vector<1x32xf32>
    %14 = vector.broadcast %13 : vector<1x32xf32> to vector<16x32xf32>
    %15 = arith.addf %12, %14 : vector<16x32xf32>
    %c0_15 = arith.constant 0 : index
    %c0_16 = arith.constant 0 : index
    %16 = vector.load %arg18[%c0_15, %c0_16] : memref<64x16xf32, #tpu.memory_space<vmem>>, vector<64x16xf32>
    %c0_17 = arith.constant 0 : index
    %c0_18 = arith.constant 0 : index
    %17 = vector.load %arg19[%c0_17, %c0_18] : memref<64x32xf32, #tpu.memory_space<vmem>>, vector<64x32xf32>
    %cst_19 = arith.constant dense<0.000000e+00> : vector<64x32xf32>
    %18 = tpu.matmul %16, %10, %cst_19 {dimension_numbers = #tpu.dot_dimension_numbers<[1], [0], [0], [1], [0, 0, 1, 1], [], []>} : vector<64x16xf32>, vector<16x32xf32>, vector<64x32xf32> -> vector<64x32xf32>
    %19 = arith.mulf %18, %17 : vector<64x32xf32>
    %cst_20 = arith.constant dense<0.000000e+00> : vector<64x32xf32>
    %20 = tpu.matmul %16, %15, %cst_20 {dimension_numbers = #tpu.dot_dimension_numbers<[1], [0], [0], [1], [0, 0, 1, 1], [], []>} : vector<64x16xf32>, vector<16x32xf32>, vector<64x32xf32> -> vector<64x32xf32>
    %21 = arith.mulf %20, %17 : vector<64x32xf32>
    %cst_21 = arith.constant 0.353553385 : f32
    %22 = vector.broadcast %cst_21 : f32 to vector<16x32xf32>
    %23 = arith.mulf %5, %22 : vector<16x32xf32>
    %cst_22 = arith.constant dense<0.000000e+00> : vector<16x64xf32>
    %24 = tpu.matmul %23, %19, %cst_22 {dimension_numbers = #tpu.dot_dimension_numbers<[1], [1], [0], [0], [0, 0, 1, 0], [], []>} : vector<16x32xf32>, vector<64x32xf32>, vector<16x64xf32> -> vector<16x64xf32>
    %c0_23 = arith.constant 0 : index
    %c0_24 = arith.constant 0 : index
    %25 = vector.load %arg21[%c0_23, %c0_24] : memref<16x64xf32, #tpu.memory_space<vmem>>, vector<16x64xf32>
    %26 = arith.addf %24, %25 : vector<16x64xf32>
    %cst_25 = arith.constant dense<0xFF800000> : vector<16xf32>
    %27 = vector.multi_reduction <maximumf>, %26, %cst_25 [1] : vector<16x64xf32> to vector<16xf32>
    %28 = vector.shape_cast %27 : vector<16xf32> to vector<16x1xf32>
    %29 = vector.broadcast %28 : vector<16x1xf32> to vector<16x64xf32>
    %30 = arith.subf %26, %29 : vector<16x64xf32>
    %31 = math.exp %30 : vector<16x64xf32>
    %c0_26 = arith.constant 0 : index
    %c0_27 = arith.constant 0 : index
    %32 = vector.load %arg20[%c0_26, %c0_27] : memref<64x64xf32, #tpu.memory_space<vmem>>, vector<64x64xf32>
    %cst_28 = arith.constant dense<0.000000e+00> : vector<16x64xf32>
    %33 = tpu.matmul %31, %32, %cst_28 {dimension_numbers = #tpu.dot_dimension_numbers<[1], [0], [0], [1], [0, 0, 1, 1], [], []>} : vector<16x64xf32>, vector<64x64xf32>, vector<16x64xf32> -> vector<16x64xf32>
    %c0_29 = arith.constant 0 : index
    %c0_30 = arith.constant 0 : index
    %34 = vector.load %arg22[%c0_29, %c0_30] : memref<16x64xf32, #tpu.memory_space<vmem>>, vector<16x64xf32>
    %35 = arith.addf %33, %34 : vector<16x64xf32>
    %36 = tpu.reciprocal %35 {approx = true} : vector<16x64xf32> -> vector<16x64xf32>
    %37 = arith.mulf %31, %36 : vector<16x64xf32>
    %cst_31 = arith.constant dense<0.000000e+00> : vector<16x32xf32>
    %38 = tpu.matmul %37, %21, %cst_31 {dimension_numbers = #tpu.dot_dimension_numbers<[1], [0], [0], [1], [0, 0, 1, 1], [], []>} : vector<16x64xf32>, vector<64x32xf32>, vector<16x32xf32> -> vector<16x32xf32>
    %c0_32 = arith.constant 0 : index
    %c0_33 = arith.constant 0 : index
    %39 = vector.load %arg8[%c0_32, %c0_33] : memref<32x32xf32, #tpu.memory_space<vmem>>, vector<32x32xf32>
    %cst_34 = arith.constant dense<0.000000e+00> : vector<16x32xf32>
    %40 = tpu.matmul %38, %39, %cst_34 {dimension_numbers = #tpu.dot_dimension_numbers<[1], [0], [0], [1], [0, 0, 1, 1], [], []>} : vector<16x32xf32>, vector<32x32xf32>, vector<16x32xf32> -> vector<16x32xf32>
    %c0_35 = arith.constant 0 : index
    %c0_36 = arith.constant 0 : index
    %41 = vector.load %arg9[%c0_35, %c0_36] : memref<1x32xf32, #tpu.memory_space<vmem>>, vector<1x32xf32>
    %42 = vector.broadcast %41 : vector<1x32xf32> to vector<16x32xf32>
    %43 = arith.addf %40, %42 : vector<16x32xf32>
    %44 = arith.addf %0, %43 : vector<16x32xf32>
    %c0_37 = arith.constant 0 : index
    %c0_38 = arith.constant 0 : index
    %45 = vector.load %arg10[%c0_37, %c0_38] : memref<1x32xf32, #tpu.memory_space<vmem>>, vector<1x32xf32>
    %c0_39 = arith.constant 0 : index
    %c0_40 = arith.constant 0 : index
    %46 = vector.load %arg11[%c0_39, %c0_40] : memref<1x32xf32, #tpu.memory_space<vmem>>, vector<1x32xf32>
    %cst_41 = arith.constant dense<0.000000e+00> : vector<16xf32>
    %47 = vector.multi_reduction <add>, %44, %cst_41 [1] : vector<16x32xf32> to vector<16xf32>
    %48 = vector.shape_cast %47 : vector<16xf32> to vector<16x1xf32>
    %cst_42 = arith.constant 3.200000e+01 : f32
    %49 = vector.broadcast %cst_42 : f32 to vector<16x1xf32>
    %50 = arith.divf %48, %49 : vector<16x1xf32>
    %51 = vector.broadcast %50 : vector<16x1xf32> to vector<16x32xf32>
    %52 = arith.subf %44, %51 : vector<16x32xf32>
    %53 = arith.mulf %52, %52 : vector<16x32xf32>
    %cst_43 = arith.constant dense<0.000000e+00> : vector<16xf32>
    %54 = vector.multi_reduction <add>, %53, %cst_43 [1] : vector<16x32xf32> to vector<16xf32>
    %55 = vector.shape_cast %54 : vector<16xf32> to vector<16x1xf32>
    %cst_44 = arith.constant 3.200000e+01 : f32
    %56 = vector.broadcast %cst_44 : f32 to vector<16x1xf32>
    %57 = arith.divf %55, %56 : vector<16x1xf32>
    %58 = vector.broadcast %50 : vector<16x1xf32> to vector<16x32xf32>
    %59 = arith.subf %44, %58 : vector<16x32xf32>
    %cst_45 = arith.constant 9.99999974E-6 : f32
    %60 = vector.broadcast %cst_45 : f32 to vector<16x1xf32>
    %61 = arith.addf %57, %60 : vector<16x1xf32>
    %62 = math.rsqrt %61 : vector<16x1xf32>
    %63 = vector.broadcast %62 : vector<16x1xf32> to vector<16x32xf32>
    %64 = arith.mulf %59, %63 : vector<16x32xf32>
    %65 = vector.broadcast %45 : vector<1x32xf32> to vector<16x32xf32>
    %66 = arith.mulf %64, %65 : vector<16x32xf32>
    %67 = vector.broadcast %46 : vector<1x32xf32> to vector<16x32xf32>
    %68 = arith.addf %66, %67 : vector<16x32xf32>
    %c0_46 = arith.constant 0 : index
    %c0_47 = arith.constant 0 : index
    %69 = vector.load %arg12[%c0_46, %c0_47] : memref<32x64xf32, #tpu.memory_space<vmem>>, vector<32x64xf32>
    %cst_48 = arith.constant dense<0.000000e+00> : vector<16x64xf32>
    %70 = tpu.matmul %68, %69, %cst_48 {dimension_numbers = #tpu.dot_dimension_numbers<[1], [0], [0], [1], [0, 0, 1, 1], [], []>} : vector<16x32xf32>, vector<32x64xf32>, vector<16x64xf32> -> vector<16x64xf32>
    %c0_49 = arith.constant 0 : index
    %c0_50 = arith.constant 0 : index
    %71 = vector.load %arg13[%c0_49, %c0_50] : memref<1x64xf32, #tpu.memory_space<vmem>>, vector<1x64xf32>
    %72 = vector.broadcast %71 : vector<1x64xf32> to vector<16x64xf32>
    %73 = arith.addf %70, %72 : vector<16x64xf32>
    %cst_51 = arith.constant 5.000000e-01 : f32
    %74 = vector.broadcast %cst_51 : f32 to vector<16x64xf32>
    %75 = arith.mulf %74, %73 : vector<16x64xf32>
    %cst_52 = arith.constant 0.707106769 : f32
    %76 = vector.broadcast %cst_52 : f32 to vector<16x64xf32>
    %77 = arith.mulf %73, %76 : vector<16x64xf32>
    %78 = math.erf %77 : vector<16x64xf32>
    %cst_53 = arith.constant 1.000000e+00 : f32
    %79 = vector.broadcast %cst_53 : f32 to vector<16x64xf32>
    %80 = arith.addf %79, %78 : vector<16x64xf32>
    %81 = arith.mulf %75, %80 : vector<16x64xf32>
    %c0_54 = arith.constant 0 : index
    %c0_55 = arith.constant 0 : index
    %82 = vector.load %arg14[%c0_54, %c0_55] : memref<64x32xf32, #tpu.memory_space<vmem>>, vector<64x32xf32>
    %cst_56 = arith.constant dense<0.000000e+00> : vector<16x32xf32>
    %83 = tpu.matmul %81, %82, %cst_56 {dimension_numbers = #tpu.dot_dimension_numbers<[1], [0], [0], [1], [0, 0, 1, 1], [], []>} : vector<16x64xf32>, vector<64x32xf32>, vector<16x32xf32> -> vector<16x32xf32>
    %c0_57 = arith.constant 0 : index
    %c0_58 = arith.constant 0 : index
    %84 = vector.load %arg15[%c0_57, %c0_58] : memref<1x32xf32, #tpu.memory_space<vmem>>, vector<1x32xf32>
    %85 = vector.broadcast %84 : vector<1x32xf32> to vector<16x32xf32>
    %86 = arith.addf %83, %85 : vector<16x32xf32>
    %87 = arith.addf %68, %86 : vector<16x32xf32>
    %c0_59 = arith.constant 0 : index
    %c0_60 = arith.constant 0 : index
    %88 = vector.load %arg16[%c0_59, %c0_60] : memref<1x32xf32, #tpu.memory_space<vmem>>, vector<1x32xf32>
    %c0_61 = arith.constant 0 : index
    %c0_62 = arith.constant 0 : index
    %89 = vector.load %arg17[%c0_61, %c0_62] : memref<1x32xf32, #tpu.memory_space<vmem>>, vector<1x32xf32>
    %cst_63 = arith.constant dense<0.000000e+00> : vector<16xf32>
    %90 = vector.multi_reduction <add>, %87, %cst_63 [1] : vector<16x32xf32> to vector<16xf32>
    %91 = vector.shape_cast %90 : vector<16xf32> to vector<16x1xf32>
    %cst_64 = arith.constant 3.200000e+01 : f32
    %92 = vector.broadcast %cst_64 : f32 to vector<16x1xf32>
    %93 = arith.divf %91, %92 : vector<16x1xf32>
    %94 = vector.broadcast %93 : vector<16x1xf32> to vector<16x32xf32>
    %95 = arith.subf %87, %94 : vector<16x32xf32>
    %96 = arith.mulf %95, %95 : vector<16x32xf32>
    %cst_65 = arith.constant dense<0.000000e+00> : vector<16xf32>
    %97 = vector.multi_reduction <add>, %96, %cst_65 [1] : vector<16x32xf32> to vector<16xf32>
    %98 = vector.shape_cast %97 : vector<16xf32> to vector<16x1xf32>
    %cst_66 = arith.constant 3.200000e+01 : f32
    %99 = vector.broadcast %cst_66 : f32 to vector<16x1xf32>
    %100 = arith.divf %98, %99 : vector<16x1xf32>
    %101 = vector.broadcast %93 : vector<16x1xf32> to vector<16x32xf32>
    %102 = arith.subf %87, %101 : vector<16x32xf32>
    %cst_67 = arith.constant 9.99999974E-6 : f32
    %103 = vector.broadcast %cst_67 : f32 to vector<16x1xf32>
    %104 = arith.addf %100, %103 : vector<16x1xf32>
    %105 = math.rsqrt %104 : vector<16x1xf32>
    %106 = vector.broadcast %105 : vector<16x1xf32> to vector<16x32xf32>
    %107 = arith.mulf %102, %106 : vector<16x32xf32>
    %108 = vector.broadcast %88 : vector<1x32xf32> to vector<16x32xf32>
    %109 = arith.mulf %107, %108 : vector<16x32xf32>
    %110 = vector.broadcast %89 : vector<1x32xf32> to vector<16x32xf32>
    %111 = arith.addf %109, %110 : vector<16x32xf32>
    %c0_68 = arith.constant 0 : index
    %c0_69 = arith.constant 0 : index
    %112 = vector.load %arg23[%c0_68, %c0_69] : memref<16x32xf32, #tpu.memory_space<vmem>>, vector<16x32xf32>
    tpu.vector_store %arg23[%c0_68, %c0_69], %111 {strides = array<i32>} : memref<16x32xf32, #tpu.memory_space<vmem>>, vector<16x32xf32>,
    return
  }
  func.func @transform_0(%arg0: i32) -> (i32, i32) {
    %c0_i32 = arith.constant 0 : i32
    %c0_i32_0 = arith.constant 0 : i32
    return %arg0, %c0_i32 : i32, i32
  }
  func.func @transform_1(%arg0: i32) -> (i32, i32) {
    %c0_i32 = arith.constant 0 : i32
    %c0_i32_0 = arith.constant 0 : i32
    %c0_i32_1 = arith.constant 0 : i32
    return %c0_i32, %c0_i32_0 : i32, i32
  }
  func.func @transform_2(%arg0: i32) -> (i32, i32) {
    %c0_i32 = arith.constant 0 : i32
    %c0_i32_0 = arith.constant 0 : i32
    %c0_i32_1 = arith.constant 0 : i32
    return %c0_i32, %c0_i32_0 : i32, i32
  }
  func.func @transform_3(%arg0: i32) -> (i32, i32) {
    %c0_i32 = arith.constant 0 : i32
    %c0_i32_0 = arith.constant 0 : i32
    %c0_i32_1 = arith.constant 0 : i32
    return %c0_i32, %c0_i32_0 : i32, i32
  }
  func.func @transform_4(%arg0: i32) -> (i32, i32) {
    %c0_i32 = arith.constant 0 : i32
    %c0_i32_0 = arith.constant 0 : i32
    %c0_i32_1 = arith.constant 0 : i32
    return %c0_i32, %c0_i32_0 : i32, i32
  }
  func.func @transform_5(%arg0: i32) -> (i32, i32) {
    %c0_i32 = arith.constant 0 : i32
    %c0_i32_0 = arith.constant 0 : i32
    %c0_i32_1 = arith.constant 0 : i32
    return %c0_i32, %c0_i32_0 : i32, i32
  }
  func.func @transform_6(%arg0: i32) -> (i32, i32) {
    %c0_i32 = arith.constant 0 : i32
    %c0_i32_0 = arith.constant 0 : i32
    %c0_i32_1 = arith.constant 0 : i32
    return %c0_i32, %c0_i32_0 : i32, i32
  }
  func.func @transform_7(%arg0: i32) -> (i32, i32) {
    %c0_i32 = arith.constant 0 : i32
    %c0_i32_0 = arith.constant 0 : i32
    %c0_i32_1 = arith.constant 0 : i32
    return %c0_i32, %c0_i32_0 : i32, i32
  }
  func.func @transform_8(%arg0: i32) -> (i32, i32) {
    %c0_i32 = arith.constant 0 : i32
    %c0_i32_0 = arith.constant 0 : i32
    %c0_i32_1 = arith.constant 0 : i32
    return %c0_i32, %c0_i32_0 : i32, i32
  }
  func.func @transform_9(%arg0: i32) -> (i32, i32) {
    %c0_i32 = arith.constant 0 : i32
    %c0_i32_0 = arith.constant 0 : i32
    %c0_i32_1 = arith.constant 0 : i32
    return %c0_i32, %c0_i32_0 : i32, i32
  }
  func.func @transform_10(%arg0: i32) -> (i32, i32) {
    %c0_i32 = arith.constant 0 : i32
    %c0_i32_0 = arith.constant 0 : i32
    %c0_i32_1 = arith.constant 0 : i32
    return %c0_i32, %c0_i32_0 : i32, i32
  }
  func.func @transform_11(%arg0: i32) -> (i32, i32) {
    %c0_i32 = arith.constant 0 : i32
    %c0_i32_0 = arith.constant 0 : i32
    %c0_i32_1 = arith.constant 0 : i32
    return %c0_i32, %c0_i32_0 : i32, i32
  }
  func.func @transform_12(%arg0: i32) -> (i32, i32) {
    %c0_i32 = arith.constant 0 : i32
    %c0_i32_0 = arith.constant 0 : i32
    %c0_i32_1 = arith.constant 0 : i32
    return %c0_i32, %c0_i32_0 : i32, i32
  }
  func.func @transform_13(%arg0: i32) -> (i32, i32) {
    %c0_i32 = arith.constant 0 : i32
    %c0_i32_0 = arith.constant 0 : i32
    %c0_i32_1 = arith.constant 0 : i32
    return %c0_i32, %c0_i32_0 : i32, i32
  }
  func.func @transform_14(%arg0: i32) -> (i32, i32) {
    %c0_i32 = arith.constant 0 : i32
    %c0_i32_0 = arith.constant 0 : i32
    %c0_i32_1 = arith.constant 0 : i32
    return %c0_i32, %c0_i32_0 : i32, i32
  }
  func.func @transform_15(%arg0: i32) -> (i32, i32) {
    %c0_i32 = arith.constant 0 : i32
    %c0_i32_0 = arith.constant 0 : i32
    %c0_i32_1 = arith.constant 0 : i32
    return %c0_i32, %c0_i32_0 : i32, i32
  }
  func.func @transform_16(%arg0: i32) -> (i32, i32) {
    %c0_i32 = arith.constant 0 : i32
    %c0_i32_0 = arith.constant 0 : i32
    %c0_i32_1 = arith.constant 0 : i32
    return %c0_i32, %c0_i32_0 : i32, i32
  }
  func.func @transform_17(%arg0: i32) -> (i32, i32) {
    %c0_i32 = arith.constant 0 : i32
    %c0_i32_0 = arith.constant 0 : i32
    %c0_i32_1 = arith.constant 0 : i32
    return %c0_i32, %c0_i32_0 : i32, i32
  }
  func.func @transform_18(%arg0: i32) -> (i32, i32) {
    %c0_i32 = arith.constant 0 : i32
    %c0_i32_0 = arith.constant 0 : i32
    %c0_i32_1 = arith.constant 0 : i32
    return %c0_i32, %c0_i32_0 : i32, i32
  }
  func.func @transform_19(%arg0: i32) -> (i32, i32) {
    %c0_i32 = arith.constant 0 : i32
    %c0_i32_0 = arith.constant 0 : i32
    %c0_i32_1 = arith.constant 0 : i32
    return %c0_i32, %c0_i32_0 : i32, i32
  }
  func.func @transform_20(%arg0: i32) -> (i32, i32) {
    %c0_i32 = arith.constant 0 : i32
    %c0_i32_0 = arith.constant 0 : i32
    %c0_i32_1 = arith.constant 0 : i32
    return %c0_i32, %c0_i32_0 : i32, i32
  }
  func.func @transform_21(%arg0: i32) -> (i32, i32) {
    %c0_i32 = arith.constant 0 : i32
    %c0_i32_0 = arith.constant 0 : i32
    %c0_i32_1 = arith.constant 0 : i32
    return %c0_i32, %c0_i32_0 : i32, i32
  }
  func.func @transform_22(%arg0: i32) -> (i32, i32) {
    %c0_i32 = arith.constant 0 : i32
    %c0_i32_0 = arith.constant 0 : i32
    return %arg0, %c0_i32 : i32, i32
  }
}

</mosaic_0001>

<llo_original>
// kernel: tpu_custom_call.1
$region0: #{tpu_custom_call.1}
  #allocation0 [shape = 'u32[]', space=smem, size = 0x4, offset = 0x4, fixed_abs, tag = 'smem constant byte address 0x4 - core index']
  #allocation1 [shape = 'u32[144,128]{1,0:T(1,128)}', space=vmem, size = 0x12000, scoped, tag = 'internal scratch']
  %s0 = inlined_call_operand.hbm [shape: f32[16,32], index: 0, kind: input, shape index: {}]
  %s1 = inlined_call_operand.vmem [shape: f32[32,32], index: 1, kind: input, shape index: {}]
  %s2 = inlined_call_operand.hbm [shape: f32[1,32], index: 2, kind: input, shape index: {}]
  %s3 = inlined_call_operand.vmem [shape: f32[32,32], index: 3, kind: input, shape index: {}]
  %s4 = inlined_call_operand.hbm [shape: f32[1,32], index: 4, kind: input, shape index: {}]
  %s5 = inlined_call_operand.vmem [shape: f32[32,32], index: 5, kind: input, shape index: {}]
  %s6 = inlined_call_operand.hbm [shape: f32[1,32], index: 6, kind: input, shape index: {}]
  %s7 = inlined_call_operand.vmem [shape: f32[32,32], index: 7, kind: input, shape index: {}]
  %s8 = inlined_call_operand.hbm [shape: f32[1,32], index: 8, kind: input, shape index: {}]
  %s9 = inlined_call_operand.hbm [shape: f32[1,32], index: 9, kind: input, shape index: {}]
  %s10 = inlined_call_operand.hbm [shape: f32[1,32], index: 10, kind: input, shape index: {}]
  %s11 = inlined_call_operand.vmem [shape: f32[32,64], index: 11, kind: input, shape index: {}]
  %s12 = inlined_call_operand.hbm [shape: f32[1,64], index: 12, kind: input, shape index: {}]
  %s13 = inlined_call_operand.vmem [shape: f32[64,32], index: 13, kind: input, shape index: {}]
  %s14 = inlined_call_operand.hbm [shape: f32[1,32], index: 14, kind: input, shape index: {}]
  %s15 = inlined_call_operand.hbm [shape: f32[1,32], index: 15, kind: input, shape index: {}]
  %s16 = inlined_call_operand.hbm [shape: f32[1,32], index: 16, kind: input, shape index: {}]
  %s17 = inlined_call_operand.vmem [shape: f32[64,16], index: 17, kind: input, shape index: {}]
  %s18 = inlined_call_operand.vmem [shape: f32[64,32], index: 18, kind: input, shape index: {}]
  %s19 = inlined_call_operand.vmem [shape: f32[64,64], index: 19, kind: input, shape index: {}]
  %s20 = inlined_call_operand.vmem [shape: f32[16,64], index: 20, kind: input, shape index: {}]
  %s21 = inlined_call_operand.vmem [shape: f32[16,64], index: 21, kind: input, shape index: {}]
  %s22 = inlined_call_operand.hbm [shape: f32[16,32], index: 22, kind: output, shape index: {}]
  %s23 = sld [smem:[#allocation0]]
  $region142: #{tpu_custom_call.1} parent=0
    _
  %s25 = ssub.s32 1, %s23
  %s26 = scalar_select 0, %s25, %s23
  $region1: #{tpu_custom_call.1} parent=0
    #allocation2 [shape = 'u8[8192]{0}', space=vmem, size = 0x2000, scoped, tag = 'input window, operand 0, single buffered']
    #allocation3 [shape = 's32[1]{0}', space=sflag, size = 0x4, scoped, tag = 'scoped memory for tpu_custom_call.1']
    #allocation4 [shape = 's32[1]{0}', space=sflag, size = 0x4, scoped, tag = 'scoped memory for tpu_custom_call.1']
    #allocation5 [shape = 'u8[512]{0}', space=vmem, size = 0x400, scoped, tag = 'input window, operand 2, single buffered']
    #allocation6 [shape = 's32[1]{0}', space=sflag, size = 0x4, scoped, tag = 'scoped memory for tpu_custom_call.1']
    #allocation7 [shape = 'u8[512]{0}', space=vmem, size = 0x400, scoped, tag = 'input window, operand 4, single buffered']
    #allocation8 [shape = 'u8[512]{0}', space=vmem, size = 0x400, scoped, tag = 'input window, operand 6, single buffered']
    #allocation9 [shape = 's32[1]{0}', space=sflag, size = 0x4, scoped, tag = 'scoped memory for tpu_custom_call.1']
    #allocation10 [shape = 'u8[512]{0}', space=vmem, size = 0x400, scoped, tag = 'input window, operand 8, single buffered']
    #allocation11 [shape = 'u8[512]{0}', space=vmem, size = 0x400, scoped, tag = 'input window, operand 9, single buffered']
    #allocation12 [shape = 's32[1]{0}', space=sflag, size = 0x4, scoped, tag = 'scoped memory for tpu_custom_call.1']
    #allocation13 [shape = 'u8[512]{0}', space=vmem, size = 0x400, scoped, tag = 'input window, operand 10, single buffered']
    #allocation14 [shape = 'u8[512]{0}', space=vmem, size = 0x400, scoped, tag = 'input window, operand 12, single buffered']
    #allocation15 [shape = 's32[1]{0}', space=sflag, size = 0x4, scoped, tag = 'scoped memory for tpu_custom_call.1']
    #allocation16 [shape = 'u8[512]{0}', space=vmem, size = 0x400, scoped, tag = 'input window, operand 14, single buffered']
    #allocation17 [shape = 'u8[512]{0}', space=vmem, size = 0x400, scoped, tag = 'input window, operand 15, single buffered']
    #allocation18 [shape = 's32[1]{0}', space=sflag, size = 0x4, scoped, tag = 'scoped memory for tpu_custom_call.1']
    #allocation19 [shape = 'u8[512]{0}', space=vmem, size = 0x400, scoped, tag = 'input window, operand 16, single buffered']
    #allocation20 [shape = 'u8[8192]{0}', space=vmem, size = 0x2000, scoped, tag = 'output window, operand 0, single buffered']
    %27 = vsyncpa [#allocation3], 0
    %28 = vsyncpa [#allocation6], 0
    %29 = vsyncpa [#allocation9], 0
    %30 = vsyncpa [#allocation12], 0
    %31 = vsyncpa [#allocation15], 0
    %32 = vsyncpa [#allocation18], 0
    %33 = vsyncpa [#allocation4], 0
    // Predicated region
    $region2: #{tpu_custom_call.1} parent=1 // pred_check
      _
    $region3: #{tpu_custom_call.1} parent=1 // pred_check_branch
      %35 = sbr.rel (0) target = $region5
    $region4: #{tpu_custom_call.1} parent=1 // pred_region
      %s37 = ssub.s32 256, 256
      %38 = vsyncadd [#allocation3], %s37
      %s39 = sshll.u32 [#allocation2], 4
      %s40 = int_to_ptr.vmem [resolvable:$true] %s39
      %45 = dma.hbm_to_vmem [thread:$0]  %s0, 256, %s40, [#allocation3], 128, 128, 8
    $region5: #{tpu_custom_call.1} parent=1 // pred_fallthru
      _
    // Predicated region
    $region6: #{tpu_custom_call.1} parent=1 // pred_check
      _
    $region7: #{tpu_custom_call.1} parent=1 // pred_check_branch
      %47 = sbr.rel (0) target = $region9
    $region8: #{tpu_custom_call.1} parent=1 // pred_region
      _
    $region9: #{tpu_custom_call.1} parent=1 // pred_fallthru
      _
    // Predicated region
    $region10: #{tpu_custom_call.1} parent=1 // pred_check
      _
    $region11: #{tpu_custom_call.1} parent=1 // pred_check_branch
      %49 = sbr.rel (0) target = $region13
    $region12: #{tpu_custom_call.1} parent=1 // pred_region
      %s51 = ssub.s32 16, 16
      %52 = vsyncadd [#allocation6], %s51
      %s54 = sshll.u32 [#allocation5], 4
      %s55 = int_to_ptr.vmem [resolvable:$true] %s54
      %57 = dma.hbm_to_vmem [thread:$0]  %s2, 16, %s55, [#allocation6]
    $region13: #{tpu_custom_call.1} parent=1 // pred_fallthru
      _
    // Predicated region
    $region14: #{tpu_custom_call.1} parent=1 // pred_check
      _
    $region15: #{tpu_custom_call.1} parent=1 // pred_check_branch
      %59 = sbr.rel (0) target = $region17
    $region16: #{tpu_custom_call.1} parent=1 // pred_region
      _
    $region17: #{tpu_custom_call.1} parent=1 // pred_fallthru
      _
    // Predicated region
    $region18: #{tpu_custom_call.1} parent=1 // pred_check
      _
    $region19: #{tpu_custom_call.1} parent=1 // pred_check_branch
      %61 = sbr.rel (0) target = $region21
    $region20: #{tpu_custom_call.1} parent=1 // pred_region
      %s63 = ssub.s32 16, 16
      %64 = vsyncadd [#allocation6], %s63
      %s66 = sshll.u32 [#allocation7], 4
      %s67 = int_to_ptr.vmem [resolvable:$true] %s66
      %69 = dma.hbm_to_vmem [thread:$0]  %s4, 16, %s67, [#allocation6]
    $region21: #{tpu_custom_call.1} parent=1 // pred_fallthru
      _
    // Predicated region
    $region22: #{tpu_custom_call.1} parent=1 // pred_check
      _
    $region23: #{tpu_custom_call.1} parent=1 // pred_check_branch
      %71 = sbr.rel (0) target = $region25
    $region24: #{tpu_custom_call.1} parent=1 // pred_region
      _
    $region25: #{tpu_custom_call.1} parent=1 // pred_fallthru
      _
    // Predicated region
    $region26: #{tpu_custom_call.1} parent=1 // pred_check
      _
    $region27: #{tpu_custom_call.1} parent=1 // pred_check_branch
      %73 = sbr.rel (0) target = $region29
    $region28: #{tpu_custom_call.1} parent=1 // pred_region
      %s75 = ssub.s32 16, 16
      %76 = vsyncadd [#allocation9], %s75
      %s78 = sshll.u32 [#allocation8], 4
      %s79 = int_to_ptr.vmem [resolvable:$true] %s78
      %81 = dma.hbm_to_vmem [thread:$0]  %s6, 16, %s79, [#allocation9]
    $region29: #{tpu_custom_call.1} parent=1 // pred_fallthru
      _
    // Predicated region
    $region30: #{tpu_custom_call.1} parent=1 // pred_check
      _
    $region31: #{tpu_custom_call.1} parent=1 // pred_check_branch
      %83 = sbr.rel (0) target = $region33
    $region32: #{tpu_custom_call.1} parent=1 // pred_region
      _
    $region33: #{tpu_custom_call.1} parent=1 // pred_fallthru
      _
    // Predicated region
    $region34: #{tpu_custom_call.1} parent=1 // pred_check
      _
    $region35: #{tpu_custom_call.1} parent=1 // pred_check_branch
      %85 = sbr.rel (0) target = $region37
    $region36: #{tpu_custom_call.1} parent=1 // pred_region
      %s87 = ssub.s32 16, 16
      %88 = vsyncadd [#allocation9], %s87
      %s90 = sshll.u32 [#allocation10], 4
      %s91 = int_to_ptr.vmem [resolvable:$true] %s90
      %93 = dma.hbm_to_vmem [thread:$0]  %s8, 16, %s91, [#allocation9]
    $region37: #{tpu_custom_call.1} parent=1 // pred_fallthru
      _
    // Predicated region
    $region38: #{tpu_custom_call.1} parent=1 // pred_check
      _
    $region39: #{tpu_custom_call.1} parent=1 // pred_check_branch
      %95 = sbr.rel (0) target = $region41
    $region40: #{tpu_custom_call.1} parent=1 // pred_region
      %s97 = ssub.s32 16, 16
      %98 = vsyncadd [#allocation12], %s97
      %s100 = sshll.u32 [#allocation11], 4
      %s101 = int_to_ptr.vmem [resolvable:$true] %s100
      %103 = dma.hbm_to_vmem [thread:$0]  %s9, 16, %s101, [#allocation12]
    $region41: #{tpu_custom_call.1} parent=1 // pred_fallthru
      _
    // Predicated region
    $region42: #{tpu_custom_call.1} parent=1 // pred_check
      _
    $region43: #{tpu_custom_call.1} parent=1 // pred_check_branch
      %105 = sbr.rel (0) target = $region45
    $region44: #{tpu_custom_call.1} parent=1 // pred_region
      %s107 = ssub.s32 16, 16
      %108 = vsyncadd [#allocation12], %s107
      %s110 = sshll.u32 [#allocation13], 4
      %s111 = int_to_ptr.vmem [resolvable:$true] %s110
      %113 = dma.hbm_to_vmem [thread:$0]  %s10, 16, %s111, [#allocation12]
    $region45: #{tpu_custom_call.1} parent=1 // pred_fallthru
      _
    // Predicated region
    $region46: #{tpu_custom_call.1} parent=1 // pred_check
      _
    $region47: #{tpu_custom_call.1} parent=1 // pred_check_branch
      %115 = sbr.rel (0) target = $region49
    $region48: #{tpu_custom_call.1} parent=1 // pred_region
      _
    $region49: #{tpu_custom_call.1} parent=1 // pred_fallthru
      _
    // Predicated region
    $region50: #{tpu_custom_call.1} parent=1 // pred_check
      _
    $region51: #{tpu_custom_call.1} parent=1 // pred_check_branch
      %117 = sbr.rel (0) target = $region53
    $region52: #{tpu_custom_call.1} parent=1 // pred_region
      %s119 = ssub.s32 16, 16
      %120 = vsyncadd [#allocation15], %s119
      %s122 = sshll.u32 [#allocation14], 4
      %s123 = int_to_ptr.vmem [resolvable:$true] %s122
      %125 = dma.hbm_to_vmem [thread:$0]  %s12, 16, %s123, [#allocation15]
    $region53: #{tpu_custom_call.1} parent=1 // pred_fallthru
      _
    // Predicated region
    $region54: #{tpu_custom_call.1} parent=1 // pred_check
      _
    $region55: #{tpu_custom_call.1} parent=1 // pred_check_branch
      %127 = sbr.rel (0) target = $region57
    $region56: #{tpu_custom_call.1} parent=1 // pred_region
      _
    $region57: #{tpu_custom_call.1} parent=1 // pred_fallthru
      _
    // Predicated region
    $region58: #{tpu_custom_call.1} parent=1 // pred_check
      _
    $region59: #{tpu_custom_call.1} parent=1 // pred_check_branch
      %129 = sbr.rel (0) target = $region61
    $region60: #{tpu_custom_call.1} parent=1 // pred_region
      %s131 = ssub.s32 16, 16
      %132 = vsyncadd [#allocation15], %s131
      %s134 = sshll.u32 [#allocation16], 4
      %s135 = int_to_ptr.vmem [resolvable:$true] %s134
      %137 = dma.hbm_to_vmem [thread:$0]  %s14, 16, %s135, [#allocation15]
    $region61: #{tpu_custom_call.1} parent=1 // pred_fallthru
      _
    // Predicated region
    $region62: #{tpu_custom_call.1} parent=1 // pred_check
      _
    $region63: #{tpu_custom_call.1} parent=1 // pred_check_branch
      %139 = sbr.rel (0) target = $region65
    $region64: #{tpu_custom_call.1} parent=1 // pred_region
      %s141 = ssub.s32 16, 16
      %142 = vsyncadd [#allocation18], %s141
      %s144 = sshll.u32 [#allocation17], 4
      %s145 = int_to_ptr.vmem [resolvable:$true] %s144
      %147 = dma.hbm_to_vmem [thread:$0]  %s15, 16, %s145, [#allocation18]
    $region65: #{tpu_custom_call.1} parent=1 // pred_fallthru
      _
    // Predicated region
    $region66: #{tpu_custom_call.1} parent=1 // pred_check
      _
    $region67: #{tpu_custom_call.1} parent=1 // pred_check_branch
      %149 = sbr.rel (0) target = $region69
    $region68: #{tpu_custom_call.1} parent=1 // pred_region
      %s151 = ssub.s32 16, 16
      %152 = vsyncadd [#allocation18], %s151
      %s154 = sshll.u32 [#allocation19], 4
      %s155 = int_to_ptr.vmem [resolvable:$true] %s154
      %157 = dma.hbm_to_vmem [thread:$0]  %s16, 16, %s155, [#allocation18]
    $region69: #{tpu_custom_call.1} parent=1 // pred_fallthru
      _
    // Predicated region
    $region70: #{tpu_custom_call.1} parent=1 // pred_check
      _
    $region71: #{tpu_custom_call.1} parent=1 // pred_check_branch
      %159 = sbr.rel (0) target = $region73
    $region72: #{tpu_custom_call.1} parent=1 // pred_region
      _
    $region73: #{tpu_custom_call.1} parent=1 // pred_fallthru
      _
    // Predicated region
    $region74: #{tpu_custom_call.1} parent=1 // pred_check
      _
    $region75: #{tpu_custom_call.1} parent=1 // pred_check_branch
      %161 = sbr.rel (0) target = $region77
    $region76: #{tpu_custom_call.1} parent=1 // pred_region
      _
    $region77: #{tpu_custom_call.1} parent=1 // pred_fallthru
      _
    // Predicated region
    $region78: #{tpu_custom_call.1} parent=1 // pred_check
      _
    $region79: #{tpu_custom_call.1} parent=1 // pred_check_branch
      %163 = sbr.rel (0) target = $region81
    $region80: #{tpu_custom_call.1} parent=1 // pred_region
      _
    $region81: #{tpu_custom_call.1} parent=1 // pred_fallthru
      _
    // Predicated region
    $region82: #{tpu_custom_call.1} parent=1 // pred_check
      _
    $region83: #{tpu_custom_call.1} parent=1 // pred_check_branch
      %165 = sbr.rel (0) target = $region85
    $region84: #{tpu_custom_call.1} parent=1 // pred_region
      _
    $region85: #{tpu_custom_call.1} parent=1 // pred_fallthru
      _
    // Predicated region
    $region86: #{tpu_custom_call.1} parent=1 // pred_check
      _
    $region87: #{tpu_custom_call.1} parent=1 // pred_check_branch
      %167 = sbr.rel (0) target = $region89
    $region88: #{tpu_custom_call.1} parent=1 // pred_region
      _
    $region89: #{tpu_custom_call.1} parent=1 // pred_fallthru
      _
    // Predicated region
    $region90: #{tpu_custom_call.1} parent=1 // pred_check
      _
    $region91: #{tpu_custom_call.1} parent=1 // pred_check_branch
      %169 = sbr.rel (0) target = $region93
    $region92: #{tpu_custom_call.1} parent=1 // pred_region
      %170 = dma.done [#allocation3], 256
    $region93: #{tpu_custom_call.1} parent=1 // pred_fallthru
      _
    // Predicated region
    $region94: #{tpu_custom_call.1} parent=1 // pred_check
      _
    $region95: #{tpu_custom_call.1} parent=1 // pred_check_branch
      %172 = sbr.rel (0) target = $region97
    $region96: #{tpu_custom_call.1} parent=1 // pred_region
      %173 = dma.done [#allocation6], 16
    $region97: #{tpu_custom_call.1} parent=1 // pred_fallthru
      _
    // Predicated region
    $region98: #{tpu_custom_call.1} parent=1 // pred_check
      _
    $region99: #{tpu_custom_call.1} parent=1 // pred_check_branch
      %175 = sbr.rel (0) target = $region101
    $region100: #{tpu_custom_call.1} parent=1 // pred_region
      %176 = dma.done [#allocation6], 16
    $region101: #{tpu_custom_call.1} parent=1 // pred_fallthru
      _
    // Predicated region
    $region102: #{tpu_custom_call.1} parent=1 // pred_check
      _
    $region103: #{tpu_custom_call.1} parent=1 // pred_check_branch
      %178 = sbr.rel (0) target = $region105
    $region104: #{tpu_custom_call.1} parent=1 // pred_region
      %179 = dma.done [#allocation9], 16
    $region105: #{tpu_custom_call.1} parent=1 // pred_fallthru
      _
    // Predicated region
    $region106: #{tpu_custom_call.1} parent=1 // pred_check
      _
    $region107: #{tpu_custom_call.1} parent=1 // pred_check_branch
      %181 = sbr.rel (0) target = $region109
    $region108: #{tpu_custom_call.1} parent=1 // pred_region
      %182 = dma.done [#allocation9], 16
    $region109: #{tpu_custom_call.1} parent=1 // pred_fallthru
      _
    // Predicated region
    $region110: #{tpu_custom_call.1} parent=1 // pred_check
      _
    $region111: #{tpu_custom_call.1} parent=1 // pred_check_branch
      %184 = sbr.rel (0) target = $region113
    $region112: #{tpu_custom_call.1} parent=1 // pred_region
      %185 = dma.done [#allocation12], 16
    $region113: #{tpu_custom_call.1} parent=1 // pred_fallthru
      _
    // Predicated region
    $region114: #{tpu_custom_call.1} parent=1 // pred_check
      _
    $region115: #{tpu_custom_call.1} parent=1 // pred_check_branch
      %187 = sbr.rel (0) target = $region117
    $region116: #{tpu_custom_call.1} parent=1 // pred_region
      %188 = dma.done [#allocation12], 16
    $region117: #{tpu_custom_call.1} parent=1 // pred_fallthru
      _
    // Predicated region
    $region118: #{tpu_custom_call.1} parent=1 // pred_check
      _
    $region119: #{tpu_custom_call.1} parent=1 // pred_check_branch
      %190 = sbr.rel (0) target = $region121
    $region120: #{tpu_custom_call.1} parent=1 // pred_region
      %191 = dma.done [#allocation15], 16
    $region121: #{tpu_custom_call.1} parent=1 // pred_fallthru
      _
    // Predicated region
    $region122: #{tpu_custom_call.1} parent=1 // pred_check
      _
    $region123: #{tpu_custom_call.1} parent=1 // pred_check_branch
      %193 = sbr.rel (0) target = $region125
    $region124: #{tpu_custom_call.1} parent=1 // pred_region
      %194 = dma.done [#allocation15], 16
    $region125: #{tpu_custom_call.1} parent=1 // pred_fallthru
      _
    // Predicated region
    $region126: #{tpu_custom_call.1} parent=1 // pred_check
      _
    $region127: #{tpu_custom_call.1} parent=1 // pred_check_branch
      %196 = sbr.rel (0) target = $region129
    $region128: #{tpu_custom_call.1} parent=1 // pred_region
      %197 = dma.done [#allocation18], 16
    $region129: #{tpu_custom_call.1} parent=1 // pred_fallthru
      _
    // Predicated region
    $region130: #{tpu_custom_call.1} parent=1 // pred_check
      _
    $region131: #{tpu_custom_call.1} parent=1 // pred_check_branch
      %199 = sbr.rel (0) target = $region133
    $region132: #{tpu_custom_call.1} parent=1 // pred_region
      %200 = dma.done [#allocation18], 16
    $region133: #{tpu_custom_call.1} parent=1 // pred_fallthru
      _
    %v201 = vld [vmem:[#allocation2] sm:$0xff]
    %v202 = vld [vmem:[#allocation2 + $0x8] sm:$0xff]
    %v203 = vld [vmem:[%s1] sm:$0xff]
    %v204 = vld [vmem:[%s1 + $0x8] sm:$0xff]
    %v205 = vld [vmem:[%s1 + $0x10] sm:$0xff]
    %v206 = vld [vmem:[%s1 + $0x18] sm:$0xff]
    %v207 = vld [vmem:[#allocation5] sm:$0x1]
    %v209 = vlaneseq
    %v210 = vshrl.u32 %v209, 7
    %v211 = vsub.s32 0, %v210
    %v212 = vrot.slane %v207, %v211
    %vm214 = vcmask 261120
    %v216 = vsel %vm214, %v201, 0
    %v219 = vsel %vm214, %v202, 0
    %221 = vmatprep.subr.mxu0 0.0
    %222 = vmatpush1.msra.mxu0 %v203
    %223 = vmatprep.subr.mxu0 0.0
    %224 = vmatpush1.msra.mxu0 %v204
    %225 = vmatprep.subr.mxu0 0.0
    %226 = vmatpush1.msra.mxu0 %v205
    %227 = vmatprep.subr.mxu0 0.0
    %228 = vmatpush1.msra.mxu0 %v206
    %229 = vmatprep.subr.mxu0 0.0
    %230 = vmatpush1.msra.mxu0 0.0
    %231 = vmatprep.subr.mxu0 0.0
    %232 = vmatpush1.msra.mxu0 0.0
    %233 = vmatprep.subr.mxu0 0.0
    %234 = vmatpush1.msra.mxu0 0.0
    %235 = vmatprep.subr.mxu0 0.0
    %236 = vmatpush1.msra.mxu0 0.0
    %237 = vmatprep.subr.mxu0 0.0
    %238 = vmatpush1.msra.mxu0 0.0
    %239 = vmatprep.subr.mxu0 0.0
    %240 = vmatpush1.msra.mxu0 0.0
    %241 = vmatprep.subr.mxu0 0.0
    %242 = vmatpush1.msra.mxu0 0.0
    %243 = vmatprep.subr.mxu0 0.0
    %244 = vmatpush1.msra.mxu0 0.0
    %245 = vmatprep.subr.mxu0 0.0
    %246 = vmatpush1.msra.mxu0 0.0
    %247 = vmatprep.subr.mxu0 0.0
    %248 = vmatpush1.msra.mxu0 0.0
    %249 = vmatprep.subr.mxu0 0.0
    %250 = vmatpush1.msra.mxu0 0.0
    %251 = vmatprep.subr.mxu0 0.0
    %252 = vmatpush1.msra.mxu0 0.0
    %253 = vmatprep.subr.mxu0 0.0
    %254 = vmatpush1.msra.mxu0 0.0
    %255 = vmatprep.subr.mxu0 0.0
    %256 = vmatpush1.msra.mxu0 0.0
    %257 = vmatprep.subr.mxu0 0.0
    %258 = vmatpush1.msra.mxu0 0.0
    %259 = vmatprep.subr.mxu0 0.0
    %260 = vmatpush1.msra.mxu0 0.0
    %261 = vmatprep.subr.mxu0 0.0
    %262 = vmatpush1.msra.mxu0 0.0
    %263 = vmatprep.subr.mxu0 0.0
    %264 = vmatpush1.msra.mxu0 0.0
    %265 = vmatprep.subr.mxu0 0.0
    %266 = vmatpush1.msra.mxu0 0.0
    %267 = vmatprep.subr.mxu0 0.0
    %268 = vmatpush1.msra.mxu0 0.0
    %269 = vmatprep.subr.mxu0 0.0
    %270 = vmatpush1.msra.mxu0 0.0
    %271 = vmatprep.subr.mxu0 0.0
    %272 = vmatpush1.msra.mxu0 0.0
    %273 = vmatprep.subr.mxu0 0.0
    %274 = vmatpush1.msra.mxu0 0.0
    %275 = vmatprep.subr.mxu0 0.0
    %276 = vmatpush1.msra.mxu0 0.0
    %277 = vmatprep.subr.mxu0 0.0
    %278 = vmatpush1.msra.mxu0 0.0
    %279 = vmatprep.subr.mxu0 0.0
    %280 = vmatpush1.msra.mxu0 0.0
    %281 = vmatprep.subr.mxu0 0.0
    %282 = vmatpush1.msra.mxu0 0.0
    %283 = vmatprep.subr.mxu0 0.0
    %284 = vmatpush1.msra.mxu0 0.0
    %285 = vmatprep.mubr.f32.mxu0 0.0
    %286 = vmatmul.mubr.f32.gmra.mrb[0].mxu0 %v216
    %v287 = vpop.f32.mrb[0].mxu0
    %v288 = vadd.f32 %v212, %v287
    %v289 = vpop.f32.mrb[0].mxu0
    %290 = vmatprep.mubr.f32.mxu0 0.0
    %291 = vmatmul.mubr.f32.gmra.mrb[0].mxu0 %v219
    %v292 = vpop.f32.mrb[0].mxu0
    %v293 = vadd.f32 %v212, %v292
    %v294 = vpop.f32.mrb[0].mxu0
    %295 = vdwg.mxu0
    %v296 = vld [vmem:[%s3] sm:$0xff]
    %v297 = vld [vmem:[%s3 + $0x8] sm:$0xff]
    %v298 = vld [vmem:[%s3 + $0x10] sm:$0xff]
    %v299 = vld [vmem:[%s3 + $0x18] sm:$0xff]
    %v300 = vld [vmem:[#allocation7] sm:$0x1]
    %v302 = vlaneseq
    %v303 = vshrl.u32 %v302, 7
    %v304 = vsub.s32 0, %v303
    %v305 = vrot.slane %v300, %v304
    %307 = vmatprep.subr.mxu0 0.0
    %308 = vmatpush1.msra.mxu0 %v296
    %309 = vmatprep.subr.mxu0 0.0
    %310 = vmatpush1.msra.mxu0 %v297
    %311 = vmatprep.subr.mxu0 0.0
    %312 = vmatpush1.msra.mxu0 %v298
    %313 = vmatprep.subr.mxu0 0.0
    %314 = vmatpush1.msra.mxu0 %v299
    %315 = vmatprep.subr.mxu0 0.0
    %316 = vmatpush1.msra.mxu0 0.0
    %317 = vmatprep.subr.mxu0 0.0
    %318 = vmatpush1.msra.mxu0 0.0
    %319 = vmatprep.subr.mxu0 0.0
    %320 = vmatpush1.msra.mxu0 0.0
    %321 = vmatprep.subr.mxu0 0.0
    %322 = vmatpush1.msra.mxu0 0.0
    %323 = vmatprep.subr.mxu0 0.0
    %324 = vmatpush1.msra.mxu0 0.0
    %325 = vmatprep.subr.mxu0 0.0
    %326 = vmatpush1.msra.mxu0 0.0
    %327 = vmatprep.subr.mxu0 0.0
    %328 = vmatpush1.msra.mxu0 0.0
    %329 = vmatprep.subr.mxu0 0.0
    %330 = vmatpush1.msra.mxu0 0.0
    %331 = vmatprep.subr.mxu0 0.0
    %332 = vmatpush1.msra.mxu0 0.0
    %333 = vmatprep.subr.mxu0 0.0
    %334 = vmatpush1.msra.mxu0 0.0
    %335 = vmatprep.subr.mxu0 0.0
    %336 = vmatpush1.msra.mxu0 0.0
    %337 = vmatprep.subr.mxu0 0.0
    %338 = vmatpush1.msra.mxu0 0.0
    %339 = vmatprep.subr.mxu0 0.0
    %340 = vmatpush1.msra.mxu0 0.0
    %341 = vmatprep.subr.mxu0 0.0
    %342 = vmatpush1.msra.mxu0 0.0
    %343 = vmatprep.subr.mxu0 0.0
    %344 = vmatpush1.msra.mxu0 0.0
    %345 = vmatprep.subr.mxu0 0.0
    %346 = vmatpush1.msra.mxu0 0.0
    %347 = vmatprep.subr.mxu0 0.0
    %348 = vmatpush1.msra.mxu0 0.0
    %349 = vmatprep.subr.mxu0 0.0
    %350 = vmatpush1.msra.mxu0 0.0
    %351 = vmatprep.subr.mxu0 0.0
    %352 = vmatpush1.msra.mxu0 0.0
    %353 = vmatprep.subr.mxu0 0.0
    %354 = vmatpush1.msra.mxu0 0.0
    %355 = vmatprep.subr.mxu0 0.0
    %356 = vmatpush1.msra.mxu0 0.0
    %357 = vmatprep.subr.mxu0 0.0
    %358 = vmatpush1.msra.mxu0 0.0
    %359 = vmatprep.subr.mxu0 0.0
    %360 = vmatpush1.msra.mxu0 0.0
    %361 = vmatprep.subr.mxu0 0.0
    %362 = vmatpush1.msra.mxu0 0.0
    %363 = vmatprep.subr.mxu0 0.0
    %364 = vmatpush1.msra.mxu0 0.0
    %365 = vmatprep.subr.mxu0 0.0
    %366 = vmatpush1.msra.mxu0 0.0
    %367 = vmatprep.subr.mxu0 0.0
    %368 = vmatpush1.msra.mxu0 0.0
    %369 = vmatprep.subr.mxu0 0.0
    %370 = vmatpush1.msra.mxu0 0.0
    %371 = vmatprep.mubr.f32.mxu0 0.0
    %372 = vmatmul.mubr.f32.gmra.mrb[0].mxu0 %v216
    %v373 = vpop.f32.mrb[0].mxu0
    %v374 = vadd.f32 %v305, %v373
    %v375 = vpop.f32.mrb[0].mxu0
    %376 = vmatprep.mubr.f32.mxu0 0.0
    %377 = vmatmul.mubr.f32.gmra.mrb[0].mxu0 %v219
    %v378 = vpop.f32.mrb[0].mxu0
    %v379 = vadd.f32 %v305, %v378
    %v380 = vpop.f32.mrb[0].mxu0
    %381 = vdwg.mxu0
    %v382 = vld [vmem:[%s5] sm:$0xff]
    %v383 = vld [vmem:[%s5 + $0x8] sm:$0xff]
    %v384 = vld [vmem:[%s5 + $0x10] sm:$0xff]
    %v385 = vld [vmem:[%s5 + $0x18] sm:$0xff]
    %v386 = vld [vmem:[#allocation8] sm:$0x1]
    %v388 = vlaneseq
    %v389 = vshrl.u32 %v388, 7
    %v390 = vsub.s32 0, %v389
    %v391 = vrot.slane %v386, %v390
    %393 = vmatprep.subr.mxu0 0.0
    %394 = vmatpush1.msra.mxu0 %v382
    %395 = vmatprep.subr.mxu0 0.0
    %396 = vmatpush1.msra.mxu0 %v383
    %397 = vmatprep.subr.mxu0 0.0
    %398 = vmatpush1.msra.mxu0 %v384
    %399 = vmatprep.subr.mxu0 0.0
    %400 = vmatpush1.msra.mxu0 %v385
    %401 = vmatprep.subr.mxu0 0.0
    %402 = vmatpush1.msra.mxu0 0.0
    %403 = vmatprep.subr.mxu0 0.0
    %404 = vmatpush1.msra.mxu0 0.0
    %405 = vmatprep.subr.mxu0 0.0
    %406 = vmatpush1.msra.mxu0 0.0
    %407 = vmatprep.subr.mxu0 0.0
    %408 = vmatpush1.msra.mxu0 0.0
    %409 = vmatprep.subr.mxu0 0.0
    %410 = vmatpush1.msra.mxu0 0.0
    %411 = vmatprep.subr.mxu0 0.0
    %412 = vmatpush1.msra.mxu0 0.0
    %413 = vmatprep.subr.mxu0 0.0
    %414 = vmatpush1.msra.mxu0 0.0
    %415 = vmatprep.subr.mxu0 0.0
    %416 = vmatpush1.msra.mxu0 0.0
    %417 = vmatprep.subr.mxu0 0.0
    %418 = vmatpush1.msra.mxu0 0.0
    %419 = vmatprep.subr.mxu0 0.0
    %420 = vmatpush1.msra.mxu0 0.0
    %421 = vmatprep.subr.mxu0 0.0
    %422 = vmatpush1.msra.mxu0 0.0
    %423 = vmatprep.subr.mxu0 0.0
    %424 = vmatpush1.msra.mxu0 0.0
    %425 = vmatprep.subr.mxu0 0.0
    %426 = vmatpush1.msra.mxu0 0.0
    %427 = vmatprep.subr.mxu0 0.0
    %428 = vmatpush1.msra.mxu0 0.0
    %429 = vmatprep.subr.mxu0 0.0
    %430 = vmatpush1.msra.mxu0 0.0
    %431 = vmatprep.subr.mxu0 0.0
    %432 = vmatpush1.msra.mxu0 0.0
    %433 = vmatprep.subr.mxu0 0.0
    %434 = vmatpush1.msra.mxu0 0.0
    %435 = vmatprep.subr.mxu0 0.0
    %436 = vmatpush1.msra.mxu0 0.0
    %437 = vmatprep.subr.mxu0 0.0
    %438 = vmatpush1.msra.mxu0 0.0
    %439 = vmatprep.subr.mxu0 0.0
    %440 = vmatpush1.msra.mxu0 0.0
    %441 = vmatprep.subr.mxu0 0.0
    %442 = vmatpush1.msra.mxu0 0.0
    %443 = vmatprep.subr.mxu0 0.0
    %444 = vmatpush1.msra.mxu0 0.0
    %445 = vmatprep.subr.mxu0 0.0
    %446 = vmatpush1.msra.mxu0 0.0
    %447 = vmatprep.subr.mxu0 0.0
    %448 = vmatpush1.msra.mxu0 0.0
    %449 = vmatprep.subr.mxu0 0.0
    %450 = vmatpush1.msra.mxu0 0.0
    %451 = vmatprep.subr.mxu0 0.0
    %452 = vmatpush1.msra.mxu0 0.0
    %453 = vmatprep.subr.mxu0 0.0
    %454 = vmatpush1.msra.mxu0 0.0
    %455 = vmatprep.subr.mxu0 0.0
    %456 = vmatpush1.msra.mxu0 0.0
    %457 = vmatprep.mubr.f32.mxu0 0.0
    %458 = vmatmul.mubr.f32.gmra.mrb[0].mxu0 %v216
    %v459 = vpop.f32.mrb[0].mxu0
    %v460 = vadd.f32 %v391, %v459
    %v461 = vpop.f32.mrb[0].mxu0
    %462 = vmatprep.mubr.f32.mxu0 0.0
    %463 = vmatmul.mubr.f32.gmra.mrb[0].mxu0 %v219
    %v464 = vpop.f32.mrb[0].mxu0
    %v465 = vadd.f32 %v391, %v464
    %v466 = vpop.f32.mrb[0].mxu0
    %467 = vdwg.mxu0
    %v468 = vld [vmem:[%s17] sm:$0xff]
    %v469 = vld [vmem:[%s17 + $0x8] sm:$0xff]
    %v470 = vld [vmem:[%s17 + $0x10] sm:$0xff]
    %v471 = vld [vmem:[%s17 + $0x18] sm:$0xff]
    %v472 = vld [vmem:[%s17 + $0x20] sm:$0xff]
    %v473 = vld [vmem:[%s17 + $0x28] sm:$0xff]
    %v474 = vld [vmem:[%s17 + $0x30] sm:$0xff]
    %v475 = vld [vmem:[%s17 + $0x38] sm:$0xff]
    %v476 = vld [vmem:[%s18] sm:$0xff]
    %v477 = vld [vmem:[%s18 + $0x8] sm:$0xff]
    %v478 = vld [vmem:[%s18 + $0x10] sm:$0xff]
    %v479 = vld [vmem:[%s18 + $0x18] sm:$0xff]
    %v480 = vld [vmem:[%s18 + $0x20] sm:$0xff]
    %v481 = vld [vmem:[%s18 + $0x28] sm:$0xff]
    %v482 = vld [vmem:[%s18 + $0x30] sm:$0xff]
    %v483 = vld [vmem:[%s18 + $0x38] sm:$0xff]
    %vm484 = vcmask 130048
    %v486 = vsel %vm484, %v468, 0
    %v489 = vsel %vm484, %v469, 0
    %v492 = vsel %vm484, %v470, 0
    %v495 = vsel %vm484, %v471, 0
    %v498 = vsel %vm484, %v472, 0
    %v501 = vsel %vm484, %v473, 0
    %v504 = vsel %vm484, %v474, 0
    %v507 = vsel %vm484, %v475, 0
    %509 = vmatprep.subr.mxu0 0.0
    %510 = vmatpush1.msra.mxu0 %v374
    %511 = vmatprep.subr.mxu0 0.0
    %512 = vmatpush1.msra.mxu0 %v379
    %513 = vmatprep.subr.mxu0 0.0
    %514 = vmatpush1.msra.mxu0 0.0
    %515 = vmatprep.subr.mxu0 0.0
    %516 = vmatpush1.msra.mxu0 0.0
    %517 = vmatprep.subr.mxu0 0.0
    %518 = vmatpush1.msra.mxu0 0.0
    %519 = vmatprep.subr.mxu0 0.0
    %520 = vmatpush1.msra.mxu0 0.0
    %521 = vmatprep.subr.mxu0 0.0
    %522 = vmatpush1.msra.mxu0 0.0
    %523 = vmatprep.subr.mxu0 0.0
    %524 = vmatpush1.msra.mxu0 0.0
    %525 = vmatprep.subr.mxu0 0.0
    %526 = vmatpush1.msra.mxu0 0.0
    %527 = vmatprep.subr.mxu0 0.0
    %528 = vmatpush1.msra.mxu0 0.0
    %529 = vmatprep.subr.mxu0 0.0
    %530 = vmatpush1.msra.mxu0 0.0
    %531 = vmatprep.subr.mxu0 0.0
    %532 = vmatpush1.msra.mxu0 0.0
    %533 = vmatprep.subr.mxu0 0.0
    %534 = vmatpush1.msra.mxu0 0.0
    %535 = vmatprep.subr.mxu0 0.0
    %536 = vmatpush1.msra.mxu0 0.0
    %537 = vmatprep.subr.mxu0 0.0
    %538 = vmatpush1.msra.mxu0 0.0
    %539 = vmatprep.subr.mxu0 0.0
    %540 = vmatpush1.msra.mxu0 0.0
    %541 = vmatprep.subr.mxu0 0.0
    %542 = vmatpush1.msra.mxu0 0.0
    %543 = vmatprep.subr.mxu0 0.0
    %544 = vmatpush1.msra.mxu0 0.0
    %545 = vmatprep.subr.mxu0 0.0
    %546 = vmatpush1.msra.mxu0 0.0
    %547 = vmatprep.subr.mxu0 0.0
    %548 = vmatpush1.msra.mxu0 0.0
    %549 = vmatprep.subr.mxu0 0.0
    %550 = vmatpush1.msra.mxu0 0.0
    %551 = vmatprep.subr.mxu0 0.0
    %552 = vmatpush1.msra.mxu0 0.0
    %553 = vmatprep.subr.mxu0 0.0
    %554 = vmatpush1.msra.mxu0 0.0
    %555 = vmatprep.subr.mxu0 0.0
    %556 = vmatpush1.msra.mxu0 0.0
    %557 = vmatprep.subr.mxu0 0.0
    %558 = vmatpush1.msra.mxu0 0.0
    %559 = vmatprep.subr.mxu0 0.0
    %560 = vmatpush1.msra.mxu0 0.0
    %561 = vmatprep.subr.mxu0 0.0
    %562 = vmatpush1.msra.mxu0 0.0
    %563 = vmatprep.subr.mxu0 0.0
    %564 = vmatpush1.msra.mxu0 0.0
    %565 = vmatprep.subr.mxu0 0.0
    %566 = vmatpush1.msra.mxu0 0.0
    %567 = vmatprep.subr.mxu0 0.0
    %568 = vmatpush1.msra.mxu0 0.0
    %569 = vmatprep.subr.mxu0 0.0
    %570 = vmatpush1.msra.mxu0 0.0
    %571 = vmatprep.subr.mxu0 0.0
    %572 = vmatpush1.msra.mxu0 0.0
    %573 = vmatprep.mubr.f32.mxu0 0.0
    %574 = vmatmul.mubr.f32.gmra.mrb[0].mxu0 %v486
    %v575 = vpop.f32.mrb[0].mxu0
    %v576 = vadd.f32 0.0, %v575
    %v577 = vpop.f32.mrb[0].mxu0
    %578 = vmatprep.mubr.f32.mxu0 0.0
    %579 = vmatmul.mubr.f32.gmra.mrb[0].mxu0 %v489
    %v580 = vpop.f32.mrb[0].mxu0
    %v581 = vadd.f32 0.0, %v580
    %v582 = vpop.f32.mrb[0].mxu0
    %583 = vmatprep.mubr.f32.mxu0 0.0
    %584 = vmatmul.mubr.f32.gmra.mrb[0].mxu0 %v492
    %v585 = vpop.f32.mrb[0].mxu0
    %v586 = vadd.f32 0.0, %v585
    %v587 = vpop.f32.mrb[0].mxu0
    %588 = vmatprep.mubr.f32.mxu0 0.0
    %589 = vmatmul.mubr.f32.gmra.mrb[0].mxu0 %v495
    %v590 = vpop.f32.mrb[0].mxu0
    %v591 = vadd.f32 0.0, %v590
    %v592 = vpop.f32.mrb[0].mxu0
    %593 = vmatprep.mubr.f32.mxu0 0.0
    %594 = vmatmul.mubr.f32.gmra.mrb[0].mxu0 %v498
    %v595 = vpop.f32.mrb[0].mxu0
    %v596 = vadd.f32 0.0, %v595
    %v597 = vpop.f32.mrb[0].mxu0
    %598 = vmatprep.mubr.f32.mxu0 0.0
    %599 = vmatmul.mubr.f32.gmra.mrb[0].mxu0 %v501
    %v600 = vpop.f32.mrb[0].mxu0
    %v601 = vadd.f32 0.0, %v600
    %v602 = vpop.f32.mrb[0].mxu0
    %603 = vmatprep.mubr.f32.mxu0 0.0
    %604 = vmatmul.mubr.f32.gmra.mrb[0].mxu0 %v504
    %v605 = vpop.f32.mrb[0].mxu0
    %v606 = vadd.f32 0.0, %v605
    %v607 = vpop.f32.mrb[0].mxu0
    %608 = vmatprep.mubr.f32.mxu0 0.0
    %609 = vmatmul.mubr.f32.gmra.mrb[0].mxu0 %v507
    %v610 = vpop.f32.mrb[0].mxu0
    %v611 = vadd.f32 0.0, %v610
    %v612 = vpop.f32.mrb[0].mxu0
    %613 = vdwg.mxu0
    %v614 = vmul.f32 %v576, %v476
    %v615 = vmul.f32 %v581, %v477
    %v616 = vmul.f32 %v586, %v478
    %v617 = vmul.f32 %v591, %v479
    %v618 = vmul.f32 %v596, %v480
    %v619 = vmul.f32 %v601, %v481
    %v620 = vmul.f32 %v606, %v482
    %v621 = vmul.f32 %v611, %v483
    %622 = vmatprep.subr.mxu0 0.0
    %623 = vmatpush1.msra.mxu0 %v460
    %624 = vmatprep.subr.mxu0 0.0
    %625 = vmatpush1.msra.mxu0 %v465
    %626 = vmatprep.subr.mxu0 0.0
    %627 = vmatpush1.msra.mxu0 0.0
    %628 = vmatprep.subr.mxu0 0.0
    %629 = vmatpush1.msra.mxu0 0.0
    %630 = vmatprep.subr.mxu0 0.0
    %631 = vmatpush1.msra.mxu0 0.0
    %632 = vmatprep.subr.mxu0 0.0
    %633 = vmatpush1.msra.mxu0 0.0
    %634 = vmatprep.subr.mxu0 0.0
    %635 = vmatpush1.msra.mxu0 0.0
    %636 = vmatprep.subr.mxu0 0.0
    %637 = vmatpush1.msra.mxu0 0.0
    %638 = vmatprep.subr.mxu0 0.0
    %639 = vmatpush1.msra.mxu0 0.0
    %640 = vmatprep.subr.mxu0 0.0
    %641 = vmatpush1.msra.mxu0 0.0
    %642 = vmatprep.subr.mxu0 0.0
    %643 = vmatpush1.msra.mxu0 0.0
    %644 = vmatprep.subr.mxu0 0.0
    %645 = vmatpush1.msra.mxu0 0.0
    %646 = vmatprep.subr.mxu0 0.0
    %647 = vmatpush1.msra.mxu0 0.0
    %648 = vmatprep.subr.mxu0 0.0
    %649 = vmatpush1.msra.mxu0 0.0
    %650 = vmatprep.subr.mxu0 0.0
    %651 = vmatpush1.msra.mxu0 0.0
    %652 = vmatprep.subr.mxu0 0.0
    %653 = vmatpush1.msra.mxu0 0.0
    %654 = vmatprep.subr.mxu0 0.0
    %655 = vmatpush1.msra.mxu0 0.0
    %656 = vmatprep.subr.mxu0 0.0
    %657 = vmatpush1.msra.mxu0 0.0
    %658 = vmatprep.subr.mxu0 0.0
    %659 = vmatpush1.msra.mxu0 0.0
    %660 = vmatprep.subr.mxu0 0.0
    %661 = vmatpush1.msra.mxu0 0.0
    %662 = vmatprep.subr.mxu0 0.0
    %663 = vmatpush1.msra.mxu0 0.0
    %664 = vmatprep.subr.mxu0 0.0
    %665 = vmatpush1.msra.mxu0 0.0
    %666 = vmatprep.subr.mxu0 0.0
    %667 = vmatpush1.msra.mxu0 0.0
    %668 = vmatprep.subr.mxu0 0.0
    %669 = vmatpush1.msra.mxu0 0.0
    %670 = vmatprep.subr.mxu0 0.0
    %671 = vmatpush1.msra.mxu0 0.0
    %672 = vmatprep.subr.mxu0 0.0
    %673 = vmatpush1.msra.mxu0 0.0
    %674 = vmatprep.subr.mxu0 0.0
    %675 = vmatpush1.msra.mxu0 0.0
    %676 = vmatprep.subr.mxu0 0.0
    %677 = vmatpush1.msra.mxu0 0.0
    %678 = vmatprep.subr.mxu0 0.0
    %679 = vmatpush1.msra.mxu0 0.0
    %680 = vmatprep.subr.mxu0 0.0
    %681 = vmatpush1.msra.mxu0 0.0
    %682 = vmatprep.subr.mxu0 0.0
    %683 = vmatpush1.msra.mxu0 0.0
    %684 = vmatprep.subr.mxu0 0.0
    %685 = vmatpush1.msra.mxu0 0.0
    %686 = vmatprep.mubr.f32.mxu0 0.0
    %687 = vmatmul.mubr.f32.gmra.mrb[0].mxu0 %v486
    %v688 = vpop.f32.mrb[0].mxu0
    %v689 = vadd.f32 0.0, %v688
    %v690 = vpop.f32.mrb[0].mxu0
    %691 = vmatprep.mubr.f32.mxu0 0.0
    %692 = vmatmul.mubr.f32.gmra.mrb[0].mxu0 %v489
    %v693 = vpop.f32.mrb[0].mxu0
    %v694 = vadd.f32 0.0, %v693
    %v695 = vpop.f32.mrb[0].mxu0
    %696 = vmatprep.mubr.f32.mxu0 0.0
    %697 = vmatmul.mubr.f32.gmra.mrb[0].mxu0 %v492
    %v698 = vpop.f32.mrb[0].mxu0
    %v699 = vadd.f32 0.0, %v698
    %v700 = vpop.f32.mrb[0].mxu0
    %701 = vmatprep.mubr.f32.mxu0 0.0
    %702 = vmatmul.mubr.f32.gmra.mrb[0].mxu0 %v495
    %v703 = vpop.f32.mrb[0].mxu0
    %v704 = vadd.f32 0.0, %v703
    %v705 = vpop.f32.mrb[0].mxu0
    %706 = vmatprep.mubr.f32.mxu0 0.0
    %707 = vmatmul.mubr.f32.gmra.mrb[0].mxu0 %v498
    %v708 = vpop.f32.mrb[0].mxu0
    %v709 = vadd.f32 0.0, %v708
    %v710 = vpop.f32.mrb[0].mxu0
    %711 = vmatprep.mubr.f32.mxu0 0.0
    %712 = vmatmul.mubr.f32.gmra.mrb[0].mxu0 %v501
    %v713 = vpop.f32.mrb[0].mxu0
    %v714 = vadd.f32 0.0, %v713
    %v715 = vpop.f32.mrb[0].mxu0
    %716 = vmatprep.mubr.f32.mxu0 0.0
    %717 = vmatmul.mubr.f32.gmra.mrb[0].mxu0 %v504
    %v718 = vpop.f32.mrb[0].mxu0
    %v719 = vadd.f32 0.0, %v718
    %v720 = vpop.f32.mrb[0].mxu0
    %721 = vmatprep.mubr.f32.mxu0 0.0
    %722 = vmatmul.mubr.f32.gmra.mrb[0].mxu0 %v507
    %v723 = vpop.f32.mrb[0].mxu0
    %v724 = vadd.f32 0.0, %v723
    %v725 = vpop.f32.mrb[0].mxu0
    %726 = vdwg.mxu0
    %v727 = vmul.f32 %v689, %v476
    %v728 = vmul.f32 %v694, %v477
    %v729 = vmul.f32 %v699, %v478
    %v730 = vmul.f32 %v704, %v479
    %v731 = vmul.f32 %v709, %v480
    %v732 = vmul.f32 %v714, %v481
    %v733 = vmul.f32 %v719, %v482
    %v734 = vmul.f32 %v724, %v483
    %v735 = vmul.f32 %v288, 0.35355338
    %v736 = vmul.f32 %v293, 0.35355338
    %v737 = vld [vmem:[%s20] sm:$0xff]
    %v738 = vld [vmem:[%s20 + $0x8] sm:$0xff]
    %v740 = vsel %vm214, %v735, 0
    %v743 = vsel %vm214, %v736, 0
    %v746 = vsel %vm214, %v614, 0
    %v749 = vsel %vm214, %v615, 0
    %v752 = vsel %vm214, %v616, 0
    %v755 = vsel %vm214, %v617, 0
    %v758 = vsel %vm214, %v618, 0
    %v761 = vsel %vm214, %v619, 0
    %v764 = vsel %vm214, %v620, 0
    %v767 = vsel %vm214, %v621, 0
    %769 = vmatprep.subr.mxu0 0.0
    %770 = vmatpush1.xpose.msra.mxu0 %v746
    %771 = vmatprep.subr.mxu0 0.0
    %772 = vmatpush1.xpose.msra.mxu0 %v749
    %773 = vmatprep.subr.mxu0 0.0
    %774 = vmatpush1.xpose.msra.mxu0 %v752
    %775 = vmatprep.subr.mxu0 0.0
    %776 = vmatpush1.xpose.msra.mxu0 %v755
    %777 = vmatprep.subr.mxu0 0.0
    %778 = vmatpush1.xpose.msra.mxu0 %v758
    %779 = vmatprep.subr.mxu0 0.0
    %780 = vmatpush1.xpose.msra.mxu0 %v761
    %781 = vmatprep.subr.mxu0 0.0
    %782 = vmatpush1.xpose.msra.mxu0 %v764
    %783 = vmatprep.subr.mxu0 0.0
    %784 = vmatpush1.xpose.msra.mxu0 %v767
    %785 = vmatprep.subr.mxu0 0.0
    %786 = vmatpush1.xpose.msra.mxu0 0.0
    %787 = vmatprep.subr.mxu0 0.0
    %788 = vmatpush1.xpose.msra.mxu0 0.0
    %789 = vmatprep.subr.mxu0 0.0
    %790 = vmatpush1.xpose.msra.mxu0 0.0
    %791 = vmatprep.subr.mxu0 0.0
    %792 = vmatpush1.xpose.msra.mxu0 0.0
    %793 = vmatprep.subr.mxu0 0.0
    %794 = vmatpush1.xpose.msra.mxu0 0.0
    %795 = vmatprep.subr.mxu0 0.0
    %796 = vmatpush1.xpose.msra.mxu0 0.0
    %797 = vmatprep.subr.mxu0 0.0
    %798 = vmatpush1.xpose.msra.mxu0 0.0
    %799 = vmatprep.subr.mxu0 0.0
    %800 = vmatpush1.xpose.msra.mxu0 0.0
    %801 = vmatprep.subr.mxu0 0.0
    %802 = vmatpush1.xpose.msra.mxu0 0.0
    %803 = vmatprep.subr.mxu0 0.0
    %804 = vmatpush1.xpose.msra.mxu0 0.0
    %805 = vmatprep.subr.mxu0 0.0
    %806 = vmatpush1.xpose.msra.mxu0 0.0
    %807 = vmatprep.subr.mxu0 0.0
    %808 = vmatpush1.xpose.msra.mxu0 0.0
    %809 = vmatprep.subr.mxu0 0.0
    %810 = vmatpush1.xpose.msra.mxu0 0.0
    %811 = vmatprep.subr.mxu0 0.0
    %812 = vmatpush1.xpose.msra.mxu0 0.0
    %813 = vmatprep.subr.mxu0 0.0
    %814 = vmatpush1.xpose.msra.mxu0 0.0
    %815 = vmatprep.subr.mxu0 0.0
    %816 = vmatpush1.xpose.msra.mxu0 0.0
    %817 = vmatprep.subr.mxu0 0.0
    %818 = vmatpush1.xpose.msra.mxu0 0.0
    %819 = vmatprep.subr.mxu0 0.0
    %820 = vmatpush1.xpose.msra.mxu0 0.0
    %821 = vmatprep.subr.mxu0 0.0
    %822 = vmatpush1.xpose.msra.mxu0 0.0
    %823 = vmatprep.subr.mxu0 0.0
    %824 = vmatpush1.xpose.msra.mxu0 0.0
    %825 = vmatprep.subr.mxu0 0.0
    %826 = vmatpush1.xpose.msra.mxu0 0.0
    %827 = vmatprep.subr.mxu0 0.0
    %828 = vmatpush1.xpose.msra.mxu0 0.0
    %829 = vmatprep.subr.mxu0 0.0
    %830 = vmatpush1.xpose.msra.mxu0 0.0
    %831 = vmatprep.subr.mxu0 0.0
    %832 = vmatpush1.xpose.msra.mxu0 0.0
    %833 = vmatprep.mubr.f32.mxu0 0.0
    %834 = vmatmul.mubr.f32.gmra.mrb[0].mxu0 %v740
    %v835 = vpop.f32.mrb[0].mxu0
    %v836 = vadd.f32 %v737, %v835
    %v837 = vpop.f32.mrb[0].mxu0
    %838 = vmatprep.mubr.f32.mxu0 0.0
    %839 = vmatmul.mubr.f32.gmra.mrb[0].mxu0 %v743
    %v840 = vpop.f32.mrb[0].mxu0
    %v841 = vadd.f32 %v738, %v840
    %v842 = vpop.f32.mrb[0].mxu0
    %843 = vdwg.mxu0
    %vm844 = vcmask 523264
    %v845 = vsel %vm844, %v836, -inf
    %846 = vmax.xlane.f32.xlu0 %v845
    %v847 = vpop.xlane.xlu0 %846
    %v848 = vsel %vm844, %v841, -inf
    %849 = vmax.xlane.f32.xlu0 %v848
    %v850 = vpop.xlane.xlu0 %849
    %v851 = vsub.f32 %v836, %v847
    %v852 = vsub.f32 %v841, %v850
    %v853 = vmul.f32 %v851, 1.442695
    %v854 = vpow.pop %v853
    %v855 = vmul.f32 %v852, 1.442695
    %v856 = vpow.pop %v855
    %v857 = vld [vmem:[%s19] sm:$0xff]
    %v858 = vld [vmem:[%s19 + $0x8] sm:$0xff]
    %v859 = vld [vmem:[%s19 + $0x10] sm:$0xff]
    %v860 = vld [vmem:[%s19 + $0x18] sm:$0xff]
    %v861 = vld [vmem:[%s19 + $0x20] sm:$0xff]
    %v862 = vld [vmem:[%s19 + $0x28] sm:$0xff]
    %v863 = vld [vmem:[%s19 + $0x30] sm:$0xff]
    %v864 = vld [vmem:[%s19 + $0x38] sm:$0xff]
    %v865 = vld [vmem:[%s21] sm:$0xff]
    %v866 = vld [vmem:[%s21 + $0x8] sm:$0xff]
    %v868 = vsel %vm844, %v854, 0
    %v871 = vsel %vm844, %v856, 0
    %873 = vmatprep.subr.mxu0 0.0
    %874 = vmatpush1.msra.mxu0 %v857
    %875 = vmatprep.subr.mxu0 0.0
    %876 = vmatpush1.msra.mxu0 %v858
    %877 = vmatprep.subr.mxu0 0.0
    %878 = vmatpush1.msra.mxu0 %v859
    %879 = vmatprep.subr.mxu0 0.0
    %880 = vmatpush1.msra.mxu0 %v860
    %881 = vmatprep.subr.mxu0 0.0
    %882 = vmatpush1.msra.mxu0 %v861
    %883 = vmatprep.subr.mxu0 0.0
    %884 = vmatpush1.msra.mxu0 %v862
    %885 = vmatprep.subr.mxu0 0.0
    %886 = vmatpush1.msra.mxu0 %v863
    %887 = vmatprep.subr.mxu0 0.0
    %888 = vmatpush1.msra.mxu0 %v864
    %889 = vmatprep.subr.mxu0 0.0
    %890 = vmatpush1.msra.mxu0 0.0
    %891 = vmatprep.subr.mxu0 0.0
    %892 = vmatpush1.msra.mxu0 0.0
    %893 = vmatprep.subr.mxu0 0.0
    %894 = vmatpush1.msra.mxu0 0.0
    %895 = vmatprep.subr.mxu0 0.0
    %896 = vmatpush1.msra.mxu0 0.0
    %897 = vmatprep.subr.mxu0 0.0
    %898 = vmatpush1.msra.mxu0 0.0
    %899 = vmatprep.subr.mxu0 0.0
    %900 = vmatpush1.msra.mxu0 0.0
    %901 = vmatprep.subr.mxu0 0.0
    %902 = vmatpush1.msra.mxu0 0.0
    %903 = vmatprep.subr.mxu0 0.0
    %904 = vmatpush1.msra.mxu0 0.0
    %905 = vmatprep.subr.mxu0 0.0
    %906 = vmatpush1.msra.mxu0 0.0
    %907 = vmatprep.subr.mxu0 0.0
    %908 = vmatpush1.msra.mxu0 0.0
    %909 = vmatprep.subr.mxu0 0.0
    %910 = vmatpush1.msra.mxu0 0.0
    %911 = vmatprep.subr.mxu0 0.0
    %912 = vmatpush1.msra.mxu0 0.0
    %913 = vmatprep.subr.mxu0 0.0
    %914 = vmatpush1.msra.mxu0 0.0
    %915 = vmatprep.subr.mxu0 0.0
    %916 = vmatpush1.msra.mxu0 0.0
    %917 = vmatprep.subr.mxu0 0.0
    %918 = vmatpush1.msra.mxu0 0.0
    %919 = vmatprep.subr.mxu0 0.0
    %920 = vmatpush1.msra.mxu0 0.0
    %921 = vmatprep.subr.mxu0 0.0
    %922 = vmatpush1.msra.mxu0 0.0
    %923 = vmatprep.subr.mxu0 0.0
    %924 = vmatpush1.msra.mxu0 0.0
    %925 = vmatprep.subr.mxu0 0.0
    %926 = vmatpush1.msra.mxu0 0.0
    %927 = vmatprep.subr.mxu0 0.0
    %928 = vmatpush1.msra.mxu0 0.0
    %929 = vmatprep.subr.mxu0 0.0
    %930 = vmatpush1.msra.mxu0 0.0
    %931 = vmatprep.subr.mxu0 0.0
    %932 = vmatpush1.msra.mxu0 0.0
    %933 = vmatprep.subr.mxu0 0.0
    %934 = vmatpush1.msra.mxu0 0.0
    %935 = vmatprep.subr.mxu0 0.0
    %936 = vmatpush1.msra.mxu0 0.0
    %937 = vmatprep.mubr.f32.mxu0 0.0
    %938 = vmatmul.mubr.f32.gmra.mrb[0].mxu0 %v868
    %v939 = vpop.f32.mrb[0].mxu0
    %v940 = vadd.f32 %v865, %v939
    %v941 = vpop.f32.mrb[0].mxu0
    %942 = vmatprep.mubr.f32.mxu0 0.0
    %943 = vmatmul.mubr.f32.gmra.mrb[0].mxu0 %v871
    %v944 = vpop.f32.mrb[0].mxu0
    %v945 = vadd.f32 %v866, %v944
    %v946 = vpop.f32.mrb[0].mxu0
    %947 = vdwg.mxu0
    %v948 = vrcp.pop %v940
    %v949 = vrcp.pop %v945
    %v950 = vmul.f32 %v854, %v948
    %v951 = vmul.f32 %v856, %v949
    %v953 = vsel %vm844, %v950, 0
    %v956 = vsel %vm844, %v951, 0
    %958 = vmatprep.subr.mxu0 0.0
    %959 = vmatpush1.msra.mxu0 %v727
    %960 = vmatprep.subr.mxu0 0.0
    %961 = vmatpush1.msra.mxu0 %v728
    %962 = vmatprep.subr.mxu0 0.0
    %963 = vmatpush1.msra.mxu0 %v729
    %964 = vmatprep.subr.mxu0 0.0
    %965 = vmatpush1.msra.mxu0 %v730
    %966 = vmatprep.subr.mxu0 0.0
    %967 = vmatpush1.msra.mxu0 %v731
    %968 = vmatprep.subr.mxu0 0.0
    %969 = vmatpush1.msra.mxu0 %v732
    %970 = vmatprep.subr.mxu0 0.0
    %971 = vmatpush1.msra.mxu0 %v733
    %972 = vmatprep.subr.mxu0 0.0
    %973 = vmatpush1.msra.mxu0 %v734
    %974 = vmatprep.subr.mxu0 0.0
    %975 = vmatpush1.msra.mxu0 0.0
    %976 = vmatprep.subr.mxu0 0.0
    %977 = vmatpush1.msra.mxu0 0.0
    %978 = vmatprep.subr.mxu0 0.0
    %979 = vmatpush1.msra.mxu0 0.0
    %980 = vmatprep.subr.mxu0 0.0
    %981 = vmatpush1.msra.mxu0 0.0
    %982 = vmatprep.subr.mxu0 0.0
    %983 = vmatpush1.msra.mxu0 0.0
    %984 = vmatprep.subr.mxu0 0.0
    %985 = vmatpush1.msra.mxu0 0.0
    %986 = vmatprep.subr.mxu0 0.0
    %987 = vmatpush1.msra.mxu0 0.0
    %988 = vmatprep.subr.mxu0 0.0
    %989 = vmatpush1.msra.mxu0 0.0
    %990 = vmatprep.subr.mxu0 0.0
    %991 = vmatpush1.msra.mxu0 0.0
    %992 = vmatprep.subr.mxu0 0.0
    %993 = vmatpush1.msra.mxu0 0.0
    %994 = vmatprep.subr.mxu0 0.0
    %995 = vmatpush1.msra.mxu0 0.0
    %996 = vmatprep.subr.mxu0 0.0
    %997 = vmatpush1.msra.mxu0 0.0
    %998 = vmatprep.subr.mxu0 0.0
    %999 = vmatpush1.msra.mxu0 0.0
    %1000 = vmatprep.subr.mxu0 0.0
    %1001 = vmatpush1.msra.mxu0 0.0
    %1002 = vmatprep.subr.mxu0 0.0
    %1003 = vmatpush1.msra.mxu0 0.0
    %1004 = vmatprep.subr.mxu0 0.0
    %1005 = vmatpush1.msra.mxu0 0.0
    %1006 = vmatprep.subr.mxu0 0.0
    %1007 = vmatpush1.msra.mxu0 0.0
    %1008 = vmatprep.subr.mxu0 0.0
    %1009 = vmatpush1.msra.mxu0 0.0
    %1010 = vmatprep.subr.mxu0 0.0
    %1011 = vmatpush1.msra.mxu0 0.0
    %1012 = vmatprep.subr.mxu0 0.0
    %1013 = vmatpush1.msra.mxu0 0.0
    %1014 = vmatprep.subr.mxu0 0.0
    %1015 = vmatpush1.msra.mxu0 0.0
    %1016 = vmatprep.subr.mxu0 0.0
    %1017 = vmatpush1.msra.mxu0 0.0
    %1018 = vmatprep.subr.mxu0 0.0
    %1019 = vmatpush1.msra.mxu0 0.0
    %1020 = vmatprep.subr.mxu0 0.0
    %1021 = vmatpush1.msra.mxu0 0.0
    %1022 = vmatprep.mubr.f32.mxu0 0.0
    %1023 = vmatmul.mubr.f32.gmra.mrb[0].mxu0 %v953
    %v1024 = vpop.f32.mrb[0].mxu0
    %v1025 = vadd.f32 0.0, %v1024
    %v1026 = vpop.f32.mrb[0].mxu0
    %1027 = vmatprep.mubr.f32.mxu0 0.0
    %1028 = vmatmul.mubr.f32.gmra.mrb[0].mxu0 %v956
    %v1029 = vpop.f32.mrb[0].mxu0
    %v1030 = vadd.f32 0.0, %v1029
    %v1031 = vpop.f32.mrb[0].mxu0
    %1032 = vdwg.mxu0
    %v1033 = vld [vmem:[%s7] sm:$0xff]
    %v1034 = vld [vmem:[%s7 + $0x8] sm:$0xff]
    %v1035 = vld [vmem:[%s7 + $0x10] sm:$0xff]
    %v1036 = vld [vmem:[%s7 + $0x18] sm:$0xff]
    %v1037 = vld [vmem:[#allocation10] sm:$0x1]
    %v1039 = vlaneseq
    %v1040 = vshrl.u32 %v1039, 7
    %v1041 = vsub.s32 0, %v1040
    %v1042 = vrot.slane %v1037, %v1041
    %v1045 = vsel %vm214, %v1025, 0
    %v1048 = vsel %vm214, %v1030, 0
    %1050 = vmatprep.subr.mxu0 0.0
    %1051 = vmatpush1.msra.mxu0 %v1033
    %1052 = vmatprep.subr.mxu0 0.0
    %1053 = vmatpush1.msra.mxu0 %v1034
    %1054 = vmatprep.subr.mxu0 0.0
    %1055 = vmatpush1.msra.mxu0 %v1035
    %1056 = vmatprep.subr.mxu0 0.0
    %1057 = vmatpush1.msra.mxu0 %v1036
    %1058 = vmatprep.subr.mxu0 0.0
    %1059 = vmatpush1.msra.mxu0 0.0
    %1060 = vmatprep.subr.mxu0 0.0
    %1061 = vmatpush1.msra.mxu0 0.0
    %1062 = vmatprep.subr.mxu0 0.0
    %1063 = vmatpush1.msra.mxu0 0.0
    %1064 = vmatprep.subr.mxu0 0.0
    %1065 = vmatpush1.msra.mxu0 0.0
    %1066 = vmatprep.subr.mxu0 0.0
    %1067 = vmatpush1.msra.mxu0 0.0
    %1068 = vmatprep.subr.mxu0 0.0
    %1069 = vmatpush1.msra.mxu0 0.0
    %1070 = vmatprep.subr.mxu0 0.0
    %1071 = vmatpush1.msra.mxu0 0.0
    %1072 = vmatprep.subr.mxu0 0.0
    %1073 = vmatpush1.msra.mxu0 0.0
    %1074 = vmatprep.subr.mxu0 0.0
    %1075 = vmatpush1.msra.mxu0 0.0
    %1076 = vmatprep.subr.mxu0 0.0
    %1077 = vmatpush1.msra.mxu0 0.0
    %1078 = vmatprep.subr.mxu0 0.0
    %1079 = vmatpush1.msra.mxu0 0.0
    %1080 = vmatprep.subr.mxu0 0.0
    %1081 = vmatpush1.msra.mxu0 0.0
    %1082 = vmatprep.subr.mxu0 0.0
    %1083 = vmatpush1.msra.mxu0 0.0
    %1084 = vmatprep.subr.mxu0 0.0
    %1085 = vmatpush1.msra.mxu0 0.0
    %1086 = vmatprep.subr.mxu0 0.0
    %1087 = vmatpush1.msra.mxu0 0.0
    %1088 = vmatprep.subr.mxu0 0.0
    %1089 = vmatpush1.msra.mxu0 0.0
    %1090 = vmatprep.subr.mxu0 0.0
    %1091 = vmatpush1.msra.mxu0 0.0
    %1092 = vmatprep.subr.mxu0 0.0
    %1093 = vmatpush1.msra.mxu0 0.0
    %1094 = vmatprep.subr.mxu0 0.0
    %1095 = vmatpush1.msra.mxu0 0.0
    %1096 = vmatprep.subr.mxu0 0.0
    %1097 = vmatpush1.msra.mxu0 0.0
    %1098 = vmatprep.subr.mxu0 0.0
    %1099 = vmatpush1.msra.mxu0 0.0
    %1100 = vmatprep.subr.mxu0 0.0
    %1101 = vmatpush1.msra.mxu0 0.0
    %1102 = vmatprep.subr.mxu0 0.0
    %1103 = vmatpush1.msra.mxu0 0.0
    %1104 = vmatprep.subr.mxu0 0.0
    %1105 = vmatpush1.msra.mxu0 0.0
    %1106 = vmatprep.subr.mxu0 0.0
    %1107 = vmatpush1.msra.mxu0 0.0
    %1108 = vmatprep.subr.mxu0 0.0
    %1109 = vmatpush1.msra.mxu0 0.0
    %1110 = vmatprep.subr.mxu0 0.0
    %1111 = vmatpush1.msra.mxu0 0.0
    %1112 = vmatprep.subr.mxu0 0.0
    %1113 = vmatpush1.msra.mxu0 0.0
    %1114 = vmatprep.mubr.f32.mxu0 0.0
    %1115 = vmatmul.mubr.f32.gmra.mrb[0].mxu0 %v1045
    %v1116 = vpop.f32.mrb[0].mxu0
    %v1117 = vadd.f32 %v1042, %v1116
    %v1118 = vpop.f32.mrb[0].mxu0
    %1119 = vmatprep.mubr.f32.mxu0 0.0
    %1120 = vmatmul.mubr.f32.gmra.mrb[0].mxu0 %v1048
    %v1121 = vpop.f32.mrb[0].mxu0
    %v1122 = vadd.f32 %v1042, %v1121
    %v1123 = vpop.f32.mrb[0].mxu0
    %1124 = vdwg.mxu0
    %v1125 = vadd.f32 %v201, %v1117
    %v1126 = vadd.f32 %v202, %v1122
    %v1127 = vld [vmem:[#allocation11] sm:$0x1]
    %v1128 = vld [vmem:[#allocation13] sm:$0x1]
    %v1129 = vsel %vm214, %v1125, 0.0
    %1130 = vadd.xlane.f32.xlu0 %v1129
    %v1131 = vpop.xlane.xlu0 %1130
    %v1132 = vsel %vm214, %v1126, 0.0
    %1133 = vadd.xlane.f32.xlu0 %v1132
    %v1134 = vpop.xlane.xlu0 %1133
    %v1135 = vrcp.pop 32.0
    %v1136 = vmul.f32 %v1131, %v1135
    %v1137 = vmul.f32 %v1134, %v1135
    %v1138 = vsub.f32 %v1125, %v1136
    %v1139 = vsub.f32 %v1126, %v1137
    %v1140 = vmul.f32 %v1138, %v1138
    %v1141 = vmul.f32 %v1139, %v1139
    %v1142 = vsel %vm214, %v1140, 0.0
    %1143 = vadd.xlane.f32.xlu0 %v1142
    %v1144 = vpop.xlane.xlu0 %1143
    %v1145 = vsel %vm214, %v1141, 0.0
    %1146 = vadd.xlane.f32.xlu0 %v1145
    %v1147 = vpop.xlane.xlu0 %1146
    %v1148 = vmul.f32 %v1144, %v1135
    %v1149 = vmul.f32 %v1147, %v1135
    %v1150 = vadd.f32 %v1148, 1e-05
    %v1151 = vadd.f32 %v1149, 1e-05
    %v1152 = vrsqrt.pop %v1150
    %v1153 = vrsqrt.pop %v1151
    %v1154 = vmul.f32 %v1138, %v1152
    %v1155 = vmul.f32 %v1139, %v1153
    %v1157 = vlaneseq
    %v1158 = vshrl.u32 %v1157, 7
    %v1159 = vsub.s32 0, %v1158
    %v1160 = vrot.slane %v1127, %v1159
    %v1162 = vmul.f32 %v1154, %v1160
    %v1163 = vmul.f32 %v1155, %v1160
    %v1165 = vlaneseq
    %v1166 = vshrl.u32 %v1165, 7
    %v1167 = vsub.s32 0, %v1166
    %v1168 = vrot.slane %v1128, %v1167
    %v1170 = vadd.f32 %v1162, %v1168
    %v1171 = vadd.f32 %v1163, %v1168
    %v1172 = vld [vmem:[%s11] sm:$0xff]
    %v1173 = vld [vmem:[%s11 + $0x8] sm:$0xff]
    %v1174 = vld [vmem:[%s11 + $0x10] sm:$0xff]
    %v1175 = vld [vmem:[%s11 + $0x18] sm:$0xff]
    %v1176 = vld [vmem:[#allocation14] sm:$0x1]
    %v1178 = vlaneseq
    %v1179 = vshrl.u32 %v1178, 7
    %v1180 = vsub.s32 0, %v1179
    %v1181 = vrot.slane %v1176, %v1180
    %v1184 = vsel %vm214, %v1170, 0
    %v1187 = vsel %vm214, %v1171, 0
    %1189 = vmatprep.subr.mxu0 0.0
    %1190 = vmatpush1.msra.mxu0 %v1172
    %1191 = vmatprep.subr.mxu0 0.0
    %1192 = vmatpush1.msra.mxu0 %v1173
    %1193 = vmatprep.subr.mxu0 0.0
    %1194 = vmatpush1.msra.mxu0 %v1174
    %1195 = vmatprep.subr.mxu0 0.0
    %1196 = vmatpush1.msra.mxu0 %v1175
    %1197 = vmatprep.subr.mxu0 0.0
    %1198 = vmatpush1.msra.mxu0 0.0
    %1199 = vmatprep.subr.mxu0 0.0
    %1200 = vmatpush1.msra.mxu0 0.0
    %1201 = vmatprep.subr.mxu0 0.0
    %1202 = vmatpush1.msra.mxu0 0.0
    %1203 = vmatprep.subr.mxu0 0.0
    %1204 = vmatpush1.msra.mxu0 0.0
    %1205 = vmatprep.subr.mxu0 0.0
    %1206 = vmatpush1.msra.mxu0 0.0
    %1207 = vmatprep.subr.mxu0 0.0
    %1208 = vmatpush1.msra.mxu0 0.0
    %1209 = vmatprep.subr.mxu0 0.0
    %1210 = vmatpush1.msra.mxu0 0.0
    %1211 = vmatprep.subr.mxu0 0.0
    %1212 = vmatpush1.msra.mxu0 0.0
    %1213 = vmatprep.subr.mxu0 0.0
    %1214 = vmatpush1.msra.mxu0 0.0
    %1215 = vmatprep.subr.mxu0 0.0
    %1216 = vmatpush1.msra.mxu0 0.0
    %1217 = vmatprep.subr.mxu0 0.0
    %1218 = vmatpush1.msra.mxu0 0.0
    %1219 = vmatprep.subr.mxu0 0.0
    %1220 = vmatpush1.msra.mxu0 0.0
    %1221 = vmatprep.subr.mxu0 0.0
    %1222 = vmatpush1.msra.mxu0 0.0
    %1223 = vmatprep.subr.mxu0 0.0
    %1224 = vmatpush1.msra.mxu0 0.0
    %1225 = vmatprep.subr.mxu0 0.0
    %1226 = vmatpush1.msra.mxu0 0.0
    %1227 = vmatprep.subr.mxu0 0.0
    %1228 = vmatpush1.msra.mxu0 0.0
    %1229 = vmatprep.subr.mxu0 0.0
    %1230 = vmatpush1.msra.mxu0 0.0
    %1231 = vmatprep.subr.mxu0 0.0
    %1232 = vmatpush1.msra.mxu0 0.0
    %1233 = vmatprep.subr.mxu0 0.0
    %1234 = vmatpush1.msra.mxu0 0.0
    %1235 = vmatprep.subr.mxu0 0.0
    %1236 = vmatpush1.msra.mxu0 0.0
    %1237 = vmatprep.subr.mxu0 0.0
    %1238 = vmatpush1.msra.mxu0 0.0
    %1239 = vmatprep.subr.mxu0 0.0
    %1240 = vmatpush1.msra.mxu0 0.0
    %1241 = vmatprep.subr.mxu0 0.0
    %1242 = vmatpush1.msra.mxu0 0.0
    %1243 = vmatprep.subr.mxu0 0.0
    %1244 = vmatpush1.msra.mxu0 0.0
    %1245 = vmatprep.subr.mxu0 0.0
    %1246 = vmatpush1.msra.mxu0 0.0
    %1247 = vmatprep.subr.mxu0 0.0
    %1248 = vmatpush1.msra.mxu0 0.0
    %1249 = vmatprep.subr.mxu0 0.0
    %1250 = vmatpush1.msra.mxu0 0.0
    %1251 = vmatprep.subr.mxu0 0.0
    %1252 = vmatpush1.msra.mxu0 0.0
    %1253 = vmatprep.mubr.f32.mxu0 0.0
    %1254 = vmatmul.mubr.f32.gmra.mrb[0].mxu0 %v1184
    %v1255 = vpop.f32.mrb[0].mxu0
    %v1256 = vadd.f32 %v1181, %v1255
    %v1257 = vpop.f32.mrb[0].mxu0
    %1258 = vmatprep.mubr.f32.mxu0 0.0
    %1259 = vmatmul.mubr.f32.gmra.mrb[0].mxu0 %v1187
    %v1260 = vpop.f32.mrb[0].mxu0
    %v1261 = vadd.f32 %v1181, %v1260
    %v1262 = vpop.f32.mrb[0].mxu0
    %1263 = vdwg.mxu0
    %v1264 = vmul.f32 %v1256, 0.5
    %v1265 = vmul.f32 %v1261, 0.5
    %v1266 = vmul.f32 %v1256, 0.70710677
    %v1267 = vmul.f32 %v1261, 0.70710677
    %v1268 = verf.f32.pop %v1266
    %v1269 = verf.f32.pop %v1267
    %v1270 = vadd.f32 %v1268, 1.0
    %v1271 = vadd.f32 %v1269, 1.0
    %v1272 = vmul.f32 %v1264, %v1270
    %v1273 = vmul.f32 %v1265, %v1271
    %v1274 = vld [vmem:[%s13] sm:$0xff]
    %v1275 = vld [vmem:[%s13 + $0x8] sm:$0xff]
    %v1276 = vld [vmem:[%s13 + $0x10] sm:$0xff]
    %v1277 = vld [vmem:[%s13 + $0x18] sm:$0xff]
    %v1278 = vld [vmem:[%s13 + $0x20] sm:$0xff]
    %v1279 = vld [vmem:[%s13 + $0x28] sm:$0xff]
    %v1280 = vld [vmem:[%s13 + $0x30] sm:$0xff]
    %v1281 = vld [vmem:[%s13 + $0x38] sm:$0xff]
    %v1282 = vld [vmem:[#allocation16] sm:$0x1]
    %v1284 = vlaneseq
    %v1285 = vshrl.u32 %v1284, 7
    %v1286 = vsub.s32 0, %v1285
    %v1287 = vrot.slane %v1282, %v1286
    %v1290 = vsel %vm844, %v1272, 0
    %v1293 = vsel %vm844, %v1273, 0
    %1295 = vmatprep.subr.mxu0 0.0
    %1296 = vmatpush1.msra.mxu0 %v1274
    %1297 = vmatprep.subr.mxu0 0.0
    %1298 = vmatpush1.msra.mxu0 %v1275
    %1299 = vmatprep.subr.mxu0 0.0
    %1300 = vmatpush1.msra.mxu0 %v1276
    %1301 = vmatprep.subr.mxu0 0.0
    %1302 = vmatpush1.msra.mxu0 %v1277
    %1303 = vmatprep.subr.mxu0 0.0
    %1304 = vmatpush1.msra.mxu0 %v1278
    %1305 = vmatprep.subr.mxu0 0.0
    %1306 = vmatpush1.msra.mxu0 %v1279
    %1307 = vmatprep.subr.mxu0 0.0
    %1308 = vmatpush1.msra.mxu0 %v1280
    %1309 = vmatprep.subr.mxu0 0.0
    %1310 = vmatpush1.msra.mxu0 %v1281
    %1311 = vmatprep.subr.mxu0 0.0
    %1312 = vmatpush1.msra.mxu0 0.0
    %1313 = vmatprep.subr.mxu0 0.0
    %1314 = vmatpush1.msra.mxu0 0.0
    %1315 = vmatprep.subr.mxu0 0.0
    %1316 = vmatpush1.msra.mxu0 0.0
    %1317 = vmatprep.subr.mxu0 0.0
    %1318 = vmatpush1.msra.mxu0 0.0
    %1319 = vmatprep.subr.mxu0 0.0
    %1320 = vmatpush1.msra.mxu0 0.0
    %1321 = vmatprep.subr.mxu0 0.0
    %1322 = vmatpush1.msra.mxu0 0.0
    %1323 = vmatprep.subr.mxu0 0.0
    %1324 = vmatpush1.msra.mxu0 0.0
    %1325 = vmatprep.subr.mxu0 0.0
    %1326 = vmatpush1.msra.mxu0 0.0
    %1327 = vmatprep.subr.mxu0 0.0
    %1328 = vmatpush1.msra.mxu0 0.0
    %1329 = vmatprep.subr.mxu0 0.0
    %1330 = vmatpush1.msra.mxu0 0.0
    %1331 = vmatprep.subr.mxu0 0.0
    %1332 = vmatpush1.msra.mxu0 0.0
    %1333 = vmatprep.subr.mxu0 0.0
    %1334 = vmatpush1.msra.mxu0 0.0
    %1335 = vmatprep.subr.mxu0 0.0
    %1336 = vmatpush1.msra.mxu0 0.0
    %1337 = vmatprep.subr.mxu0 0.0
    %1338 = vmatpush1.msra.mxu0 0.0
    %1339 = vmatprep.subr.mxu0 0.0
    %1340 = vmatpush1.msra.mxu0 0.0
    %1341 = vmatprep.subr.mxu0 0.0
    %1342 = vmatpush1.msra.mxu0 0.0
    %1343 = vmatprep.subr.mxu0 0.0
    %1344 = vmatpush1.msra.mxu0 0.0
    %1345 = vmatprep.subr.mxu0 0.0
    %1346 = vmatpush1.msra.mxu0 0.0
    %1347 = vmatprep.subr.mxu0 0.0
    %1348 = vmatpush1.msra.mxu0 0.0
    %1349 = vmatprep.subr.mxu0 0.0
    %1350 = vmatpush1.msra.mxu0 0.0
    %1351 = vmatprep.subr.mxu0 0.0
    %1352 = vmatpush1.msra.mxu0 0.0
    %1353 = vmatprep.subr.mxu0 0.0
    %1354 = vmatpush1.msra.mxu0 0.0
    %1355 = vmatprep.subr.mxu0 0.0
    %1356 = vmatpush1.msra.mxu0 0.0
    %1357 = vmatprep.subr.mxu0 0.0
    %1358 = vmatpush1.msra.mxu0 0.0
    %1359 = vmatprep.mubr.f32.mxu0 0.0
    %1360 = vmatmul.mubr.f32.gmra.mrb[0].mxu0 %v1290
    %v1361 = vpop.f32.mrb[0].mxu0
    %v1362 = vadd.f32 %v1287, %v1361
    %v1363 = vpop.f32.mrb[0].mxu0
    %1364 = vmatprep.mubr.f32.mxu0 0.0
    %1365 = vmatmul.mubr.f32.gmra.mrb[0].mxu0 %v1293
    %v1366 = vpop.f32.mrb[0].mxu0
    %v1367 = vadd.f32 %v1287, %v1366
    %v1368 = vpop.f32.mrb[0].mxu0
    %1369 = vdwg.mxu0
    %v1370 = vadd.f32 %v1170, %v1362
    %v1371 = vadd.f32 %v1171, %v1367
    %v1372 = vld [vmem:[#allocation17] sm:$0x1]
    %v1373 = vld [vmem:[#allocation19] sm:$0x1]
    %v1374 = vsel %vm214, %v1370, 0.0
    %1375 = vadd.xlane.f32.xlu0 %v1374
    %v1376 = vpop.xlane.xlu0 %1375
    %v1377 = vsel %vm214, %v1371, 0.0
    %1378 = vadd.xlane.f32.xlu0 %v1377
    %v1379 = vpop.xlane.xlu0 %1378
    %v1380 = vmul.f32 %v1376, %v1135
    %v1381 = vmul.f32 %v1379, %v1135
    %v1382 = vsub.f32 %v1370, %v1380
    %v1383 = vsub.f32 %v1371, %v1381
    %v1384 = vmul.f32 %v1382, %v1382
    %v1385 = vmul.f32 %v1383, %v1383
    %v1386 = vsel %vm214, %v1384, 0.0
    %1387 = vadd.xlane.f32.xlu0 %v1386
    %v1388 = vpop.xlane.xlu0 %1387
    %v1389 = vsel %vm214, %v1385, 0.0
    %1390 = vadd.xlane.f32.xlu0 %v1389
    %v1391 = vpop.xlane.xlu0 %1390
    %v1392 = vmul.f32 %v1388, %v1135
    %v1393 = vmul.f32 %v1391, %v1135
    %v1394 = vadd.f32 %v1392, 1e-05
    %v1395 = vadd.f32 %v1393, 1e-05
    %v1396 = vrsqrt.pop %v1394
    %v1397 = vrsqrt.pop %v1395
    %v1398 = vmul.f32 %v1382, %v1396
    %v1399 = vmul.f32 %v1383, %v1397
    %v1401 = vlaneseq
    %v1402 = vshrl.u32 %v1401, 7
    %v1403 = vsub.s32 0, %v1402
    %v1404 = vrot.slane %v1372, %v1403
    %v1406 = vmul.f32 %v1398, %v1404
    %v1407 = vmul.f32 %v1399, %v1404
    %v1409 = vlaneseq
    %v1410 = vshrl.u32 %v1409, 7
    %v1411 = vsub.s32 0, %v1410
    %v1412 = vrot.slane %v1373, %v1411
    %v1414 = vadd.f32 %v1406, %v1412
    %v1415 = vadd.f32 %v1407, %v1412
    %1416 = vst.msk [vmem:[#allocation20] sm:$0xff] %vm214, %v1414
    %1417 = vst.msk [vmem:[#allocation20 + $0x8] sm:$0xff] %vm214, %v1415
    // Predicated region
    $region134: #{tpu_custom_call.1} parent=1 // pred_check
      _
    $region135: #{tpu_custom_call.1} parent=1 // pred_check_branch
      %1419 = sbr.rel (0) target = $region137
    $region136: #{tpu_custom_call.1} parent=1 // pred_region
      %s1421 = ssub.s32 256, 256
      %1422 = vsyncadd [#allocation4], %s1421
      %s1423 = sshll.u32 [#allocation20], 4
      %s1424 = int_to_ptr.vmem [resolvable:$true] %s1423
      %1429 = dma.vmem_to_hbm [thread:$0]  %s1424, 256, %s22, [#allocation4], 128, 128, 8
    $region137: #{tpu_custom_call.1} parent=1 // pred_fallthru
      _
    // Predicated region
    $region138: #{tpu_custom_call.1} parent=1 // pred_check
      _
    $region139: #{tpu_custom_call.1} parent=1 // pred_check_branch
      %1431 = sbr.rel (0) target = $region141
    $region140: #{tpu_custom_call.1} parent=1 // pred_region
      %1432 = dma.done [#allocation4], 256
    $region141: #{tpu_custom_call.1} parent=1 // pred_fallthru
      _
    %1433 = vsyncpa [#allocation3], 1
    %1434 = vsyncpa [#allocation6], 1
    %1435 = vsyncpa [#allocation9], 1
    %1436 = vsyncpa [#allocation12], 1
    %1437 = vsyncpa [#allocation15], 1
    %1438 = vsyncpa [#allocation18], 1
    %1439 = vsyncpa [#allocation4], 1

</llo_original>
